<compile_context>
chip_gen: v7x
topology: tpu7x:2x2x1
jax: 0.10.0
libtpu: 0.0.40
codegen_flags: <defaults>
</compile_context>

<pallas_src>
import math

import jax
import jax.numpy as jnp
import numpy as np
from jax import lax
from jax.experimental import pallas as pl
from jax.experimental.pallas import tpu as pltpu

# ---------------- small config (consistent with ModelConfig semantics) -------
DIM = 128
N_HEADS = 4
N_KV_HEADS = 2
HEAD_DIM = DIM // N_HEADS          # 32
N_REP = N_HEADS // N_KV_HEADS      # 2
SEQ = 16
BATCH = 2
MULTIPLE_OF = 64
NORM_EPS = 1e-5
# hidden_dim=None rule from MLP.__init__
_h = int(2 * (4 * DIM) / 3)
FFN_DIM = MULTIPLE_OF * ((_h + MULTIPLE_OF - 1) // MULTIPLE_OF)  # 384


# ---------------------------------- kernel -----------------------------------
def _rmsnorm(x, w, eps):
    # x: (S, D) f32, w: (1, D) f32
    ms = jnp.mean(x * x, axis=-1, keepdims=True)
    return x * lax.rsqrt(ms + eps) * w


def decoder_layer_kernel(
    x_ref,                             # (1, S, D) f32
    cos_ref, sin_ref,                  # (S, HEAD_DIM) f32:  [cos|cos], [-sin|+sin]
    wq_ref, wk_ref, wv_ref, wo_ref,    # bf16: (D, H*hd) (D, H*hd) (D, H*hd) (H*hd, D)
    w1_ref, w2_ref, w3_ref,            # bf16: (D, FF) (FF, D) (D, FF)
    attn_nw_ref, ffn_nw_ref,           # (1, D) f32
    out_ref,                           # (1, S, D) f32
):
    x = x_ref[0].astype(jnp.float32)          # (S, D)
    S = x.shape[0]
    half = HEAD_DIM // 2

    cos_t = cos_ref[...]                       # (S, hd)
    sin_t = sin_ref[...]                       # (S, hd)  (sign already folded in)

    # ---------------- attention sub-block ----------------
    xn = _rmsnorm(x, attn_nw_ref[...], NORM_EPS).astype(jnp.bfloat16)

    # projections: bf16 inputs, f32 accumulation.  wq already carries 1/sqrt(hd);
    # wk/wv are already replicated to all H heads (GQA) in the wrapper.
    q = jnp.dot(xn, wq_ref[...], preferred_element_type=jnp.float32)   # (S, H*hd)
    k = jnp.dot(xn, wk_ref[...], preferred_element_type=jnp.float32)   # (S, H*hd)
    v = jnp.dot(xn, wv_ref[...], preferred_element_type=jnp.float32)   # (S, H*hd)
    v = v.astype(jnp.bfloat16)

    def rope(t):
        # t: (S, hd) in [real-half | imag-half] layout (wrapper permuted the weights)
        swapped = jnp.concatenate([t[:, half:], t[:, :half]], axis=1)
        return t * cos_t + swapped * sin_t

    # causal mask (S, S), same for every head
    row = lax.broadcasted_iota(jnp.int32, (S, S), 0)
    col = lax.broadcasted_iota(jnp.int32, (S, S), 1)
    neg = jnp.where(row >= col, 0.0, -1e30).astype(jnp.float32)

    outs = []
    for h in range(N_HEADS):                    # static unrolled loop over heads
        lo, hi = h * HEAD_DIM, (h + 1) * HEAD_DIM
        qh = rope(q[:, lo:hi]).astype(jnp.bfloat16)     # (S, hd)
        kh = rope(k[:, lo:hi]).astype(jnp.bfloat16)     # (S, hd)
        vh = v[:, lo:hi]                                # (S, hd) bf16

        s = lax.dot_general(qh, kh, (((1,), (1,)), ((), ())),
                            preferred_element_type=jnp.float32) + neg   # (S, S)
        m = jnp.max(s, axis=-1, keepdims=True)
        p = jnp.exp(s - m)
        l = jnp.sum(p, axis=-1, keepdims=True)
        p = (p * pl.reciprocal(l, approx=True)).astype(jnp.bfloat16)
        outs.append(jnp.dot(p, vh, preferred_element_type=jnp.float32))  # (S, hd)

    # one lane-dense (S, H*hd) @ (H*hd, D) matmul instead of per-head accumulation
    attn = jnp.concatenate(outs, axis=1).astype(jnp.bfloat16)            # (S, H*hd)
    attn_proj = jnp.dot(attn, wo_ref[...], preferred_element_type=jnp.float32)

    h1 = x + attn_proj

    # ---------------- feed-forward sub-block ----------------
    hn = _rmsnorm(h1, ffn_nw_ref[...], NORM_EPS).astype(jnp.bfloat16)
    a = jnp.dot(hn, w1_ref[...], preferred_element_type=jnp.float32)     # (S, FF)
    b = jnp.dot(hn, w3_ref[...], preferred_element_type=jnp.float32)     # (S, FF)
    g = a * pl.reciprocal(1.0 + jnp.exp(-a), approx=True)                # silu (EUP)
    ff = jnp.dot((g * b).astype(jnp.bfloat16), w2_ref[...],
                 preferred_element_type=jnp.float32)                     # (S, D)

    out_ref[0] = (h1 + ff).astype(out_ref.dtype)


# -------------------------------- wrapper -------------------------------------
def decoder_layer(x, freqs_cos, freqs_sin, params):
    """x: (B, S, D) f32; freqs_cos/sin: (S, HEAD_DIM//2) f32."""
    B, S, D = x.shape
    hd = HEAD_DIM
    half = hd // 2

    # within-head de-interleave permutation: new col p (<half) <- old 2p (real part),
    # new col half+p <- old 2p+1 (imag part).  Attention scores are invariant to a
    # permutation applied consistently to q and k channels, so only wq/wk need it.
    perm = np.empty((hd,), np.int64)
    perm[:half] = np.arange(0, hd, 2)
    perm[half:] = np.arange(1, hd, 2)

    q_cols = np.concatenate([h * hd + perm for h in range(N_HEADS)])
    k_cols = np.concatenate([(h // N_REP) * hd + perm for h in range(N_HEADS)])
    v_cols = np.concatenate([(h // N_REP) * hd + np.arange(hd) for h in range(N_HEADS)])

    scale = 1.0 / math.sqrt(hd)
    # (In a real model these weight preps would be done once at load time.)
    wq_b = (params["wq"] * scale)[:, q_cols].astype(jnp.bfloat16)    # (D, H*hd)
    wk_b = params["wk"][:, k_cols].astype(jnp.bfloat16)              # (D, H*hd) GQA-repeated
    wv_b = params["wv"][:, v_cols].astype(jnp.bfloat16)              # (D, H*hd) GQA-repeated
    wo_b = params["wo"].astype(jnp.bfloat16)                         # (H*hd, D)
    w1_b = params["w1"].astype(jnp.bfloat16)
    w2_b = params["w2"].astype(jnp.bfloat16)
    w3_b = params["w3"].astype(jnp.bfloat16)

    # rope tables in the [real-half | imag-half] layout, one copy for all heads
    cos_t = jnp.concatenate([freqs_cos, freqs_cos], axis=1)          # (S, hd)
    sin_t = jnp.concatenate([-freqs_sin, freqs_sin], axis=1)         # (S, hd)

    attn_nw = params["attn_norm"].reshape(1, D)
    ffn_nw = params["ffn_norm"].reshape(1, D)

    full = lambda a: pl.BlockSpec(a.shape, lambda b: (0,) * a.ndim)

    return pl.pallas_call(
        decoder_layer_kernel,
        out_shape=jax.ShapeDtypeStruct((B, S, D), x.dtype),
        grid=(B,),
        in_specs=[
            pl.BlockSpec((1, S, D), lambda b: (b, 0, 0)),            # x
            full(cos_t), full(sin_t),
            full(wq_b), full(wk_b), full(wv_b), full(wo_b),
            full(w1_b), full(w2_b), full(w3_b),
            full(attn_nw), full(ffn_nw),
        ],
        out_specs=pl.BlockSpec((1, S, D), lambda b: (b, 0, 0)),
        compiler_params=pltpu.CompilerParams(dimension_semantics=("parallel",)),
    )(x, cos_t, sin_t, wq_b, wk_b, wv_b, wo_b, w1_b, w2_b, w3_b, attn_nw, ffn_nw)


# ------------------------- pure-JAX reference (torch semantics) ---------------
def _rmsnorm_ref(x, w, eps):
    return x * lax.rsqrt(jnp.mean(x * x, axis=-1, keepdims=True) + eps) * w


def decoder_layer_ref(x, freqs_cos, freqs_sin, params):
    B, S, D = x.shape
    hd = HEAD_DIM

    xn = _rmsnorm_ref(x, params["attn_norm"], NORM_EPS)
    q = (xn @ params["wq"]).reshape(B, S, N_HEADS, hd)
    k = (xn @ params["wk"]).reshape(B, S, N_KV_HEADS, hd)
    v = (xn @ params["wv"]).reshape(B, S, N_KV_HEADS, hd)

    def rope(t):
        tr = t.reshape(t.shape[:-1] + (hd // 2, 2))
        r, i = tr[..., 0], tr[..., 1]
        c = freqs_cos[None, :, None, :]
        s = freqs_sin[None, :, None, :]
        return jnp.stack([r * c - i * s, r * s + i * c], axis=-1).reshape(t.shape)

    q, k = rope(q), rope(k)
    k = jnp.repeat(k, N_REP, axis=2)   # matches torch repeat_kv ordering
    v = jnp.repeat(v, N_REP, axis=2)

    qT = q.transpose(0, 2, 1, 3)       # (B, H, S, hd)
    kT = k.transpose(0, 2, 1, 3)
    vT = v.transpose(0, 2, 1, 3)
    scores = jnp.einsum("bhqd,bhkd->bhqk", qT, kT) / math.sqrt(hd)
    mask = jnp.where(jnp.arange(S)[:, None] >= jnp.arange(S)[None, :], 0.0, -1e30)
    scores = scores + mask[None, None]
    p = jax.nn.softmax(scores, axis=-1)
    out = jnp.einsum("bhqk,bhkd->bhqd", p, vT)
    out = out.transpose(0, 2, 1, 3).reshape(B, S, D) @ params["wo"]
    h = x + out

    hn = _rmsnorm_ref(h, params["ffn_norm"], NORM_EPS)
    ff = (jax.nn.silu(hn @ params["w1"]) * (hn @ params["w3"])) @ params["w2"]
    return h + ff


# ----------------------------------- main --------------------------------------
if __name__ == "__main__":
    key = jax.random.PRNGKey(0)
    ks = jax.random.split(key, 9)
    scale = 0.05

    params = {
        "wq": scale * jax.random.normal(ks[0], (DIM, N_HEADS * HEAD_DIM), jnp.float32),
        "wk": scale * jax.random.normal(ks[1], (DIM, N_KV_HEADS * HEAD_DIM), jnp.float32),
        "wv": scale * jax.random.normal(ks[2], (DIM, N_KV_HEADS * HEAD_DIM), jnp.float32),
        "wo": scale * jax.random.normal(ks[3], (N_HEADS * HEAD_DIM, DIM), jnp.float32),
        "w1": scale * jax.random.normal(ks[4], (DIM, FFN_DIM), jnp.float32),
        "w2": scale * jax.random.normal(ks[5], (FFN_DIM, DIM), jnp.float32),
        "w3": scale * jax.random.normal(ks[6], (DIM, FFN_DIM), jnp.float32),
        "attn_norm": jnp.ones((DIM,), jnp.float32),   # RMSNorm init = ones
        "ffn_norm": jnp.ones((DIM,), jnp.float32),
    }

    x = jax.random.normal(ks[7], (BATCH, SEQ, DIM), jnp.float32)

    # rotary frequencies (llama-style precompute), deterministic
    inv_freq = 1.0 / (10000.0 ** (np.arange(0, HEAD_DIM, 2, dtype=np.float32) / HEAD_DIM))
    t = np.arange(SEQ, dtype=np.float32)
    angles = np.outer(t, inv_freq)                     # (S, hd//2)
    freqs_cos = jnp.asarray(np.cos(angles), jnp.float32)
    freqs_sin = jnp.asarray(np.sin(angles), jnp.float32)

    out = decoder_layer(x, freqs_cos, freqs_sin, params)
    out = jax.block_until_ready(out)

    ref = decoder_layer_ref(x, freqs_cos, freqs_sin, params)
    np.testing.assert_allclose(np.asarray(out), np.asarray(ref), rtol=2e-2, atol=2e-2)

    print("KERNEL_OK")
</pallas_src>

<mosaic_0001>
module attributes {stable_mosaic.version = 11 : i64} {
  func.func @decoder_layer_kernel(%arg0: i32, %arg1: memref<1x16x128xf32, #tpu.memory_space<vmem>>, %arg2: memref<16x32xf32, #tpu.memory_space<vmem>>, %arg3: memref<16x32xf32, #tpu.memory_space<vmem>>, %arg4: memref<128x128xbf16, #tpu.memory_space<vmem>>, %arg5: memref<128x128xbf16, #tpu.memory_space<vmem>>, %arg6: memref<128x128xbf16, #tpu.memory_space<vmem>>, %arg7: memref<128x128xbf16, #tpu.memory_space<vmem>>, %arg8: memref<128x384xbf16, #tpu.memory_space<vmem>>, %arg9: memref<384x128xbf16, #tpu.memory_space<vmem>>, %arg10: memref<128x384xbf16, #tpu.memory_space<vmem>>, %arg11: memref<1x128xf32, #tpu.memory_space<vmem>>, %arg12: memref<1x128xf32, #tpu.memory_space<vmem>>, %arg13: memref<1x16x128xf32, #tpu.memory_space<vmem>>) attributes {dimension_semantics = [#tpu.dimension_semantics<parallel>], iteration_bounds = array<i64: 2>, scalar_prefetch = 0 : i64, scratch_operands = 0 : i64, tpu.core_type = #tpu.core_type<tc>, window_params = [{transform_indices = @transform_0, window_bounds = array<i64: 1, 16, 128>}, {pipeline_mode = #tpu.pipeline_mode<synchronous>, transform_indices = @transform_1, window_bounds = array<i64: 16, 32>}, {pipeline_mode = #tpu.pipeline_mode<synchronous>, transform_indices = @transform_2, window_bounds = array<i64: 16, 32>}, {pipeline_mode = #tpu.pipeline_mode<synchronous>, transform_indices = @transform_3, window_bounds = array<i64: 128, 128>}, {pipeline_mode = #tpu.pipeline_mode<synchronous>, transform_indices = @transform_4, window_bounds = array<i64: 128, 128>}, {pipeline_mode = #tpu.pipeline_mode<synchronous>, transform_indices = @transform_5, window_bounds = array<i64: 128, 128>}, {pipeline_mode = #tpu.pipeline_mode<synchronous>, transform_indices = @transform_6, window_bounds = array<i64: 128, 128>}, {pipeline_mode = #tpu.pipeline_mode<synchronous>, transform_indices = @transform_7, window_bounds = array<i64: 128, 384>}, {pipeline_mode = #tpu.pipeline_mode<synchronous>, transform_indices = @transform_8, window_bounds = array<i64: 384, 128>}, {pipeline_mode = #tpu.pipeline_mode<synchronous>, transform_indices = @transform_9, window_bounds = array<i64: 128, 384>}, {pipeline_mode = #tpu.pipeline_mode<synchronous>, transform_indices = @transform_10, window_bounds = array<i64: 1, 128>}, {pipeline_mode = #tpu.pipeline_mode<synchronous>, transform_indices = @transform_11, window_bounds = array<i64: 1, 128>}, {transform_indices = @transform_12, window_bounds = array<i64: 1, 16, 128>}]} {
    %c0 = arith.constant 0 : index
    %c0_0 = arith.constant 0 : index
    %c0_1 = arith.constant 0 : index
    %0 = vector.load %arg1[%c0, %c0_0, %c0_1] : memref<1x16x128xf32, #tpu.memory_space<vmem>>, vector<1x16x128xf32>
    %1 = vector.shape_cast %0 : vector<1x16x128xf32> to vector<16x128xf32>
    %c0_2 = arith.constant 0 : index
    %c0_3 = arith.constant 0 : index
    %2 = vector.load %arg2[%c0_2, %c0_3] : memref<16x32xf32, #tpu.memory_space<vmem>>, vector<16x32xf32>
    %c0_4 = arith.constant 0 : index
    %c0_5 = arith.constant 0 : index
    %3 = vector.load %arg3[%c0_4, %c0_5] : memref<16x32xf32, #tpu.memory_space<vmem>>, vector<16x32xf32>
    %c0_6 = arith.constant 0 : index
    %c0_7 = arith.constant 0 : index
    %4 = vector.load %arg11[%c0_6, %c0_7] : memref<1x128xf32, #tpu.memory_space<vmem>>, vector<1x128xf32>
    %5 = arith.mulf %1, %1 : vector<16x128xf32>
    %cst = arith.constant dense<0.000000e+00> : vector<16xf32>
    %6 = vector.multi_reduction <add>, %5, %cst [1] : vector<16x128xf32> to vector<16xf32>
    %7 = vector.shape_cast %6 : vector<16xf32> to vector<16x1xf32>
    %cst_8 = arith.constant 1.280000e+02 : f32
    %8 = vector.broadcast %cst_8 : f32 to vector<16x1xf32>
    %9 = arith.divf %7, %8 : vector<16x1xf32>
    %cst_9 = arith.constant 9.99999974E-6 : f32
    %10 = vector.broadcast %cst_9 : f32 to vector<16x1xf32>
    %11 = arith.addf %9, %10 : vector<16x1xf32>
    %12 = math.rsqrt %11 : vector<16x1xf32>
    %13 = vector.broadcast %12 : vector<16x1xf32> to vector<16x128xf32>
    %14 = arith.mulf %1, %13 : vector<16x128xf32>
    %15 = vector.broadcast %4 : vector<1x128xf32> to vector<16x128xf32>
    %16 = arith.mulf %14, %15 : vector<16x128xf32>
    %17 = arith.truncf %16 : vector<16x128xf32> to vector<16x128xbf16>
    %c0_10 = arith.constant 0 : index
    %c0_11 = arith.constant 0 : index
    %18 = vector.load %arg4[%c0_10, %c0_11] : memref<128x128xbf16, #tpu.memory_space<vmem>>, vector<128x128xbf16>
    %cst_12 = arith.constant dense<0.000000e+00> : vector<16x128xf32>
    %19 = tpu.matmul %17, %18, %cst_12 {dimension_numbers = #tpu.dot_dimension_numbers<[1], [0], [0], [1], [0, 0, 1, 1], [], []>} : vector<16x128xbf16>, vector<128x128xbf16>, vector<16x128xf32> -> vector<16x128xf32>
    %c0_13 = arith.constant 0 : index
    %c0_14 = arith.constant 0 : index
    %20 = vector.load %arg5[%c0_13, %c0_14] : memref<128x128xbf16, #tpu.memory_space<vmem>>, vector<128x128xbf16>
    %cst_15 = arith.constant dense<0.000000e+00> : vector<16x128xf32>
    %21 = tpu.matmul %17, %20, %cst_15 {dimension_numbers = #tpu.dot_dimension_numbers<[1], [0], [0], [1], [0, 0, 1, 1], [], []>} : vector<16x128xbf16>, vector<128x128xbf16>, vector<16x128xf32> -> vector<16x128xf32>
    %c0_16 = arith.constant 0 : index
    %c0_17 = arith.constant 0 : index
    %22 = vector.load %arg6[%c0_16, %c0_17] : memref<128x128xbf16, #tpu.memory_space<vmem>>, vector<128x128xbf16>
    %cst_18 = arith.constant dense<0.000000e+00> : vector<16x128xf32>
    %23 = tpu.matmul %17, %22, %cst_18 {dimension_numbers = #tpu.dot_dimension_numbers<[1], [0], [0], [1], [0, 0, 1, 1], [], []>} : vector<16x128xbf16>, vector<128x128xbf16>, vector<16x128xf32> -> vector<16x128xf32>
    %24 = arith.truncf %23 : vector<16x128xf32> to vector<16x128xbf16>
    %25 = tpu.iota {dimensions = array<i32: 0>} : vector<16x16xi32>
    %26 = tpu.iota {dimensions = array<i32: 1>} : vector<16x16xi32>
    %27 = arith.cmpi sge, %25, %26 : vector<16x16xi32>
    %cst_19 = arith.constant 0.000000e+00 : f32
    %cst_20 = arith.constant -1.000000e+30 : f32
    %28 = vector.broadcast %cst_19 : f32 to vector<16x16xf32>
    %29 = vector.broadcast %cst_20 : f32 to vector<16x16xf32>
    %30 = arith.select %27, %28, %29 : vector<16x16xi1>, vector<16x16xf32>
    %31 = vector.extract_strided_slice %19 {offsets = [0, 0], sizes = [16, 32], strides = [1, 1]} : vector<16x128xf32> to vector<16x32xf32>
    %32 = vector.extract_strided_slice %31 {offsets = [0, 16], sizes = [16, 16], strides = [1, 1]} : vector<16x32xf32> to vector<16x16xf32>
    %33 = vector.extract_strided_slice %31 {offsets = [0, 0], sizes = [16, 16], strides = [1, 1]} : vector<16x32xf32> to vector<16x16xf32>
    %34 = tpu.concatenate %32, %33 in 1 : vector<16x16xf32>, vector<16x16xf32> -> vector<16x32xf32>
    %35 = arith.mulf %31, %2 : vector<16x32xf32>
    %36 = arith.mulf %34, %3 : vector<16x32xf32>
    %37 = arith.addf %35, %36 : vector<16x32xf32>
    %38 = arith.truncf %37 : vector<16x32xf32> to vector<16x32xbf16>
    %39 = vector.extract_strided_slice %21 {offsets = [0, 0], sizes = [16, 32], strides = [1, 1]} : vector<16x128xf32> to vector<16x32xf32>
    %40 = vector.extract_strided_slice %39 {offsets = [0, 16], sizes = [16, 16], strides = [1, 1]} : vector<16x32xf32> to vector<16x16xf32>
    %41 = vector.extract_strided_slice %39 {offsets = [0, 0], sizes = [16, 16], strides = [1, 1]} : vector<16x32xf32> to vector<16x16xf32>
    %42 = tpu.concatenate %40, %41 in 1 : vector<16x16xf32>, vector<16x16xf32> -> vector<16x32xf32>
    %43 = arith.mulf %39, %2 : vector<16x32xf32>
    %44 = arith.mulf %42, %3 : vector<16x32xf32>
    %45 = arith.addf %43, %44 : vector<16x32xf32>
    %46 = arith.truncf %45 : vector<16x32xf32> to vector<16x32xbf16>
    %47 = vector.extract_strided_slice %24 {offsets = [0, 0], sizes = [16, 32], strides = [1, 1]} : vector<16x128xbf16> to vector<16x32xbf16>
    %cst_21 = arith.constant dense<0.000000e+00> : vector<16x16xf32>
    %48 = tpu.matmul %38, %46, %cst_21 {dimension_numbers = #tpu.dot_dimension_numbers<[1], [1], [0], [0], [0, 0, 1, 0], [], []>} : vector<16x32xbf16>, vector<16x32xbf16>, vector<16x16xf32> -> vector<16x16xf32>
    %49 = arith.addf %48, %30 : vector<16x16xf32>
    %cst_22 = arith.constant dense<0xFF800000> : vector<16xf32>
    %50 = vector.multi_reduction <maximumf>, %49, %cst_22 [1] : vector<16x16xf32> to vector<16xf32>
    %51 = vector.shape_cast %50 : vector<16xf32> to vector<16x1xf32>
    %52 = vector.broadcast %51 : vector<16x1xf32> to vector<16x16xf32>
    %53 = arith.subf %49, %52 : vector<16x16xf32>
    %54 = math.exp %53 : vector<16x16xf32>
    %cst_23 = arith.constant dense<0.000000e+00> : vector<16xf32>
    %55 = vector.multi_reduction <add>, %54, %cst_23 [1] : vector<16x16xf32> to vector<16xf32>
    %56 = vector.shape_cast %55 : vector<16xf32> to vector<16x1xf32>
    %57 = tpu.reciprocal %56 {approx = true} : vector<16x1xf32> -> vector<16x1xf32>
    %58 = vector.broadcast %57 : vector<16x1xf32> to vector<16x16xf32>
    %59 = arith.mulf %54, %58 : vector<16x16xf32>
    %60 = arith.truncf %59 : vector<16x16xf32> to vector<16x16xbf16>
    %cst_24 = arith.constant dense<0.000000e+00> : vector<16x32xf32>
    %61 = tpu.matmul %60, %47, %cst_24 {dimension_numbers = #tpu.dot_dimension_numbers<[1], [0], [0], [1], [0, 0, 1, 1], [], []>} : vector<16x16xbf16>, vector<16x32xbf16>, vector<16x32xf32> -> vector<16x32xf32>
    %62 = vector.extract_strided_slice %19 {offsets = [0, 32], sizes = [16, 32], strides = [1, 1]} : vector<16x128xf32> to vector<16x32xf32>
    %63 = vector.extract_strided_slice %62 {offsets = [0, 16], sizes = [16, 16], strides = [1, 1]} : vector<16x32xf32> to vector<16x16xf32>
    %64 = vector.extract_strided_slice %62 {offsets = [0, 0], sizes = [16, 16], strides = [1, 1]} : vector<16x32xf32> to vector<16x16xf32>
    %65 = tpu.concatenate %63, %64 in 1 : vector<16x16xf32>, vector<16x16xf32> -> vector<16x32xf32>
    %66 = arith.mulf %62, %2 : vector<16x32xf32>
    %67 = arith.mulf %65, %3 : vector<16x32xf32>
    %68 = arith.addf %66, %67 : vector<16x32xf32>
    %69 = arith.truncf %68 : vector<16x32xf32> to vector<16x32xbf16>
    %70 = vector.extract_strided_slice %21 {offsets = [0, 32], sizes = [16, 32], strides = [1, 1]} : vector<16x128xf32> to vector<16x32xf32>
    %71 = vector.extract_strided_slice %70 {offsets = [0, 16], sizes = [16, 16], strides = [1, 1]} : vector<16x32xf32> to vector<16x16xf32>
    %72 = vector.extract_strided_slice %70 {offsets = [0, 0], sizes = [16, 16], strides = [1, 1]} : vector<16x32xf32> to vector<16x16xf32>
    %73 = tpu.concatenate %71, %72 in 1 : vector<16x16xf32>, vector<16x16xf32> -> vector<16x32xf32>
    %74 = arith.mulf %70, %2 : vector<16x32xf32>
    %75 = arith.mulf %73, %3 : vector<16x32xf32>
    %76 = arith.addf %74, %75 : vector<16x32xf32>
    %77 = arith.truncf %76 : vector<16x32xf32> to vector<16x32xbf16>
    %78 = vector.extract_strided_slice %24 {offsets = [0, 32], sizes = [16, 32], strides = [1, 1]} : vector<16x128xbf16> to vector<16x32xbf16>
    %cst_25 = arith.constant dense<0.000000e+00> : vector<16x16xf32>
    %79 = tpu.matmul %69, %77, %cst_25 {dimension_numbers = #tpu.dot_dimension_numbers<[1], [1], [0], [0], [0, 0, 1, 0], [], []>} : vector<16x32xbf16>, vector<16x32xbf16>, vector<16x16xf32> -> vector<16x16xf32>
    %80 = arith.addf %79, %30 : vector<16x16xf32>
    %cst_26 = arith.constant dense<0xFF800000> : vector<16xf32>
    %81 = vector.multi_reduction <maximumf>, %80, %cst_26 [1] : vector<16x16xf32> to vector<16xf32>
    %82 = vector.shape_cast %81 : vector<16xf32> to vector<16x1xf32>
    %83 = vector.broadcast %82 : vector<16x1xf32> to vector<16x16xf32>
    %84 = arith.subf %80, %83 : vector<16x16xf32>
    %85 = math.exp %84 : vector<16x16xf32>
    %cst_27 = arith.constant dense<0.000000e+00> : vector<16xf32>
    %86 = vector.multi_reduction <add>, %85, %cst_27 [1] : vector<16x16xf32> to vector<16xf32>
    %87 = vector.shape_cast %86 : vector<16xf32> to vector<16x1xf32>
    %88 = tpu.reciprocal %87 {approx = true} : vector<16x1xf32> -> vector<16x1xf32>
    %89 = vector.broadcast %88 : vector<16x1xf32> to vector<16x16xf32>
    %90 = arith.mulf %85, %89 : vector<16x16xf32>
    %91 = arith.truncf %90 : vector<16x16xf32> to vector<16x16xbf16>
    %cst_28 = arith.constant dense<0.000000e+00> : vector<16x32xf32>
    %92 = tpu.matmul %91, %78, %cst_28 {dimension_numbers = #tpu.dot_dimension_numbers<[1], [0], [0], [1], [0, 0, 1, 1], [], []>} : vector<16x16xbf16>, vector<16x32xbf16>, vector<16x32xf32> -> vector<16x32xf32>
    %93 = vector.extract_strided_slice %19 {offsets = [0, 64], sizes = [16, 32], strides = [1, 1]} : vector<16x128xf32> to vector<16x32xf32>
    %94 = vector.extract_strided_slice %93 {offsets = [0, 16], sizes = [16, 16], strides = [1, 1]} : vector<16x32xf32> to vector<16x16xf32>
    %95 = vector.extract_strided_slice %93 {offsets = [0, 0], sizes = [16, 16], strides = [1, 1]} : vector<16x32xf32> to vector<16x16xf32>
    %96 = tpu.concatenate %94, %95 in 1 : vector<16x16xf32>, vector<16x16xf32> -> vector<16x32xf32>
    %97 = arith.mulf %93, %2 : vector<16x32xf32>
    %98 = arith.mulf %96, %3 : vector<16x32xf32>
    %99 = arith.addf %97, %98 : vector<16x32xf32>
    %100 = arith.truncf %99 : vector<16x32xf32> to vector<16x32xbf16>
    %101 = vector.extract_strided_slice %21 {offsets = [0, 64], sizes = [16, 32], strides = [1, 1]} : vector<16x128xf32> to vector<16x32xf32>
    %102 = vector.extract_strided_slice %101 {offsets = [0, 16], sizes = [16, 16], strides = [1, 1]} : vector<16x32xf32> to vector<16x16xf32>
    %103 = vector.extract_strided_slice %101 {offsets = [0, 0], sizes = [16, 16], strides = [1, 1]} : vector<16x32xf32> to vector<16x16xf32>
    %104 = tpu.concatenate %102, %103 in 1 : vector<16x16xf32>, vector<16x16xf32> -> vector<16x32xf32>
    %105 = arith.mulf %101, %2 : vector<16x32xf32>
    %106 = arith.mulf %104, %3 : vector<16x32xf32>
    %107 = arith.addf %105, %106 : vector<16x32xf32>
    %108 = arith.truncf %107 : vector<16x32xf32> to vector<16x32xbf16>
    %109 = vector.extract_strided_slice %24 {offsets = [0, 64], sizes = [16, 32], strides = [1, 1]} : vector<16x128xbf16> to vector<16x32xbf16>
    %cst_29 = arith.constant dense<0.000000e+00> : vector<16x16xf32>
    %110 = tpu.matmul %100, %108, %cst_29 {dimension_numbers = #tpu.dot_dimension_numbers<[1], [1], [0], [0], [0, 0, 1, 0], [], []>} : vector<16x32xbf16>, vector<16x32xbf16>, vector<16x16xf32> -> vector<16x16xf32>
    %111 = arith.addf %110, %30 : vector<16x16xf32>
    %cst_30 = arith.constant dense<0xFF800000> : vector<16xf32>
    %112 = vector.multi_reduction <maximumf>, %111, %cst_30 [1] : vector<16x16xf32> to vector<16xf32>
    %113 = vector.shape_cast %112 : vector<16xf32> to vector<16x1xf32>
    %114 = vector.broadcast %113 : vector<16x1xf32> to vector<16x16xf32>
    %115 = arith.subf %111, %114 : vector<16x16xf32>
    %116 = math.exp %115 : vector<16x16xf32>
    %cst_31 = arith.constant dense<0.000000e+00> : vector<16xf32>
    %117 = vector.multi_reduction <add>, %116, %cst_31 [1] : vector<16x16xf32> to vector<16xf32>
    %118 = vector.shape_cast %117 : vector<16xf32> to vector<16x1xf32>
    %119 = tpu.reciprocal %118 {approx = true} : vector<16x1xf32> -> vector<16x1xf32>
    %120 = vector.broadcast %119 : vector<16x1xf32> to vector<16x16xf32>
    %121 = arith.mulf %116, %120 : vector<16x16xf32>
    %122 = arith.truncf %121 : vector<16x16xf32> to vector<16x16xbf16>
    %cst_32 = arith.constant dense<0.000000e+00> : vector<16x32xf32>
    %123 = tpu.matmul %122, %109, %cst_32 {dimension_numbers = #tpu.dot_dimension_numbers<[1], [0], [0], [1], [0, 0, 1, 1], [], []>} : vector<16x16xbf16>, vector<16x32xbf16>, vector<16x32xf32> -> vector<16x32xf32>
    %124 = vector.extract_strided_slice %19 {offsets = [0, 96], sizes = [16, 32], strides = [1, 1]} : vector<16x128xf32> to vector<16x32xf32>
    %125 = vector.extract_strided_slice %124 {offsets = [0, 16], sizes = [16, 16], strides = [1, 1]} : vector<16x32xf32> to vector<16x16xf32>
    %126 = vector.extract_strided_slice %124 {offsets = [0, 0], sizes = [16, 16], strides = [1, 1]} : vector<16x32xf32> to vector<16x16xf32>
    %127 = tpu.concatenate %125, %126 in 1 : vector<16x16xf32>, vector<16x16xf32> -> vector<16x32xf32>
    %128 = arith.mulf %124, %2 : vector<16x32xf32>
    %129 = arith.mulf %127, %3 : vector<16x32xf32>
    %130 = arith.addf %128, %129 : vector<16x32xf32>
    %131 = arith.truncf %130 : vector<16x32xf32> to vector<16x32xbf16>
    %132 = vector.extract_strided_slice %21 {offsets = [0, 96], sizes = [16, 32], strides = [1, 1]} : vector<16x128xf32> to vector<16x32xf32>
    %133 = vector.extract_strided_slice %132 {offsets = [0, 16], sizes = [16, 16], strides = [1, 1]} : vector<16x32xf32> to vector<16x16xf32>
    %134 = vector.extract_strided_slice %132 {offsets = [0, 0], sizes = [16, 16], strides = [1, 1]} : vector<16x32xf32> to vector<16x16xf32>
    %135 = tpu.concatenate %133, %134 in 1 : vector<16x16xf32>, vector<16x16xf32> -> vector<16x32xf32>
    %136 = arith.mulf %132, %2 : vector<16x32xf32>
    %137 = arith.mulf %135, %3 : vector<16x32xf32>
    %138 = arith.addf %136, %137 : vector<16x32xf32>
    %139 = arith.truncf %138 : vector<16x32xf32> to vector<16x32xbf16>
    %140 = vector.extract_strided_slice %24 {offsets = [0, 96], sizes = [16, 32], strides = [1, 1]} : vector<16x128xbf16> to vector<16x32xbf16>
    %cst_33 = arith.constant dense<0.000000e+00> : vector<16x16xf32>
    %141 = tpu.matmul %131, %139, %cst_33 {dimension_numbers = #tpu.dot_dimension_numbers<[1], [1], [0], [0], [0, 0, 1, 0], [], []>} : vector<16x32xbf16>, vector<16x32xbf16>, vector<16x16xf32> -> vector<16x16xf32>
    %142 = arith.addf %141, %30 : vector<16x16xf32>
    %cst_34 = arith.constant dense<0xFF800000> : vector<16xf32>
    %143 = vector.multi_reduction <maximumf>, %142, %cst_34 [1] : vector<16x16xf32> to vector<16xf32>
    %144 = vector.shape_cast %143 : vector<16xf32> to vector<16x1xf32>
    %145 = vector.broadcast %144 : vector<16x1xf32> to vector<16x16xf32>
    %146 = arith.subf %142, %145 : vector<16x16xf32>
    %147 = math.exp %146 : vector<16x16xf32>
    %cst_35 = arith.constant dense<0.000000e+00> : vector<16xf32>
    %148 = vector.multi_reduction <add>, %147, %cst_35 [1] : vector<16x16xf32> to vector<16xf32>
    %149 = vector.shape_cast %148 : vector<16xf32> to vector<16x1xf32>
    %150 = tpu.reciprocal %149 {approx = true} : vector<16x1xf32> -> vector<16x1xf32>
    %151 = vector.broadcast %150 : vector<16x1xf32> to vector<16x16xf32>
    %152 = arith.mulf %147, %151 : vector<16x16xf32>
    %153 = arith.truncf %152 : vector<16x16xf32> to vector<16x16xbf16>
    %cst_36 = arith.constant dense<0.000000e+00> : vector<16x32xf32>
    %154 = tpu.matmul %153, %140, %cst_36 {dimension_numbers = #tpu.dot_dimension_numbers<[1], [0], [0], [1], [0, 0, 1, 1], [], []>} : vector<16x16xbf16>, vector<16x32xbf16>, vector<16x32xf32> -> vector<16x32xf32>
    %155 = tpu.concatenate %61, %92, %123, %154 in 1 : vector<16x32xf32>, vector<16x32xf32>, vector<16x32xf32>, vector<16x32xf32> -> vector<16x128xf32>
    %156 = arith.truncf %155 : vector<16x128xf32> to vector<16x128xbf16>
    %c0_37 = arith.constant 0 : index
    %c0_38 = arith.constant 0 : index
    %157 = vector.load %arg7[%c0_37, %c0_38] : memref<128x128xbf16, #tpu.memory_space<vmem>>, vector<128x128xbf16>
    %cst_39 = arith.constant dense<0.000000e+00> : vector<16x128xf32>
    %158 = tpu.matmul %156, %157, %cst_39 {dimension_numbers = #tpu.dot_dimension_numbers<[1], [0], [0], [1], [0, 0, 1, 1], [], []>} : vector<16x128xbf16>, vector<128x128xbf16>, vector<16x128xf32> -> vector<16x128xf32>
    %159 = arith.addf %1, %158 : vector<16x128xf32>
    %c0_40 = arith.constant 0 : index
    %c0_41 = arith.constant 0 : index
    %160 = vector.load %arg12[%c0_40, %c0_41] : memref<1x128xf32, #tpu.memory_space<vmem>>, vector<1x128xf32>
    %161 = arith.mulf %159, %159 : vector<16x128xf32>
    %cst_42 = arith.constant dense<0.000000e+00> : vector<16xf32>
    %162 = vector.multi_reduction <add>, %161, %cst_42 [1] : vector<16x128xf32> to vector<16xf32>
    %163 = vector.shape_cast %162 : vector<16xf32> to vector<16x1xf32>
    %cst_43 = arith.constant 1.280000e+02 : f32
    %164 = vector.broadcast %cst_43 : f32 to vector<16x1xf32>
    %165 = arith.divf %163, %164 : vector<16x1xf32>
    %cst_44 = arith.constant 9.99999974E-6 : f32
    %166 = vector.broadcast %cst_44 : f32 to vector<16x1xf32>
    %167 = arith.addf %165, %166 : vector<16x1xf32>
    %168 = math.rsqrt %167 : vector<16x1xf32>
    %169 = vector.broadcast %168 : vector<16x1xf32> to vector<16x128xf32>
    %170 = arith.mulf %159, %169 : vector<16x128xf32>
    %171 = vector.broadcast %160 : vector<1x128xf32> to vector<16x128xf32>
    %172 = arith.mulf %170, %171 : vector<16x128xf32>
    %173 = arith.truncf %172 : vector<16x128xf32> to vector<16x128xbf16>
    %c0_45 = arith.constant 0 : index
    %c0_46 = arith.constant 0 : index
    %174 = vector.load %arg8[%c0_45, %c0_46] : memref<128x384xbf16, #tpu.memory_space<vmem>>, vector<128x384xbf16>
    %cst_47 = arith.constant dense<0.000000e+00> : vector<16x384xf32>
    %175 = tpu.matmul %173, %174, %cst_47 {dimension_numbers = #tpu.dot_dimension_numbers<[1], [0], [0], [1], [0, 0, 1, 1], [], []>} : vector<16x128xbf16>, vector<128x384xbf16>, vector<16x384xf32> -> vector<16x384xf32>
    %c0_48 = arith.constant 0 : index
    %c0_49 = arith.constant 0 : index
    %176 = vector.load %arg10[%c0_48, %c0_49] : memref<128x384xbf16, #tpu.memory_space<vmem>>, vector<128x384xbf16>
    %cst_50 = arith.constant dense<0.000000e+00> : vector<16x384xf32>
    %177 = tpu.matmul %173, %176, %cst_50 {dimension_numbers = #tpu.dot_dimension_numbers<[1], [0], [0], [1], [0, 0, 1, 1], [], []>} : vector<16x128xbf16>, vector<128x384xbf16>, vector<16x384xf32> -> vector<16x384xf32>
    %cst_51 = arith.constant 0.000000e+00 : f32
    %178 = vector.broadcast %cst_51 : f32 to vector<16x384xf32>
    %179 = arith.subf %178, %175 : vector<16x384xf32>
    %180 = math.exp %179 : vector<16x384xf32>
    %cst_52 = arith.constant 1.000000e+00 : f32
    %181 = vector.broadcast %cst_52 : f32 to vector<16x384xf32>
    %182 = arith.addf %181, %180 : vector<16x384xf32>
    %183 = tpu.reciprocal %182 {approx = true} : vector<16x384xf32> -> vector<16x384xf32>
    %184 = arith.mulf %175, %183 : vector<16x384xf32>
    %185 = arith.mulf %184, %177 : vector<16x384xf32>
    %186 = arith.truncf %185 : vector<16x384xf32> to vector<16x384xbf16>
    %c0_53 = arith.constant 0 : index
    %c0_54 = arith.constant 0 : index
    %187 = vector.load %arg9[%c0_53, %c0_54] : memref<384x128xbf16, #tpu.memory_space<vmem>>, vector<384x128xbf16>
    %cst_55 = arith.constant dense<0.000000e+00> : vector<16x128xf32>
    %188 = tpu.matmul %186, %187, %cst_55 {dimension_numbers = #tpu.dot_dimension_numbers<[1], [0], [0], [1], [0, 0, 1, 1], [], []>} : vector<16x384xbf16>, vector<384x128xbf16>, vector<16x128xf32> -> vector<16x128xf32>
    %189 = arith.addf %159, %188 : vector<16x128xf32>
    %c0_56 = arith.constant 0 : index
    %c0_57 = arith.constant 0 : index
    %c0_58 = arith.constant 0 : index
    %190 = vector.load %arg13[%c0_56, %c0_57, %c0_58] : memref<1x16x128xf32, #tpu.memory_space<vmem>>, vector<1x16x128xf32>
    %191 = vector.shape_cast %190 : vector<1x16x128xf32> to vector<16x128xf32>
    %192 = vector.shape_cast %189 : vector<16x128xf32> to vector<1x16x128xf32>
    tpu.vector_store %arg13[%c0_56, %c0_57, %c0_58], %192 {strides = array<i32>} : memref<1x16x128xf32, #tpu.memory_space<vmem>>, vector<1x16x128xf32>,
    return
  }
  func.func @transform_0(%arg0: i32) -> (i32, i32, i32) {
    %c0_i32 = arith.constant 0 : i32
    %c0_i32_0 = arith.constant 0 : i32
    %c0_i32_1 = arith.constant 0 : i32
    return %arg0, %c0_i32, %c0_i32_0 : i32, i32, i32
  }
  func.func @transform_1(%arg0: i32) -> (i32, i32) {
    %c0_i32 = arith.constant 0 : i32
    %c0_i32_0 = arith.constant 0 : i32
    %c0_i32_1 = arith.constant 0 : i32
    return %c0_i32, %c0_i32_0 : i32, i32
  }
  func.func @transform_2(%arg0: i32) -> (i32, i32) {
    %c0_i32 = arith.constant 0 : i32
    %c0_i32_0 = arith.constant 0 : i32
    %c0_i32_1 = arith.constant 0 : i32
    return %c0_i32, %c0_i32_0 : i32, i32
  }
  func.func @transform_3(%arg0: i32) -> (i32, i32) {
    %c0_i32 = arith.constant 0 : i32
    %c0_i32_0 = arith.constant 0 : i32
    %c0_i32_1 = arith.constant 0 : i32
    return %c0_i32, %c0_i32_0 : i32, i32
  }
  func.func @transform_4(%arg0: i32) -> (i32, i32) {
    %c0_i32 = arith.constant 0 : i32
    %c0_i32_0 = arith.constant 0 : i32
    %c0_i32_1 = arith.constant 0 : i32
    return %c0_i32, %c0_i32_0 : i32, i32
  }
  func.func @transform_5(%arg0: i32) -> (i32, i32) {
    %c0_i32 = arith.constant 0 : i32
    %c0_i32_0 = arith.constant 0 : i32
    %c0_i32_1 = arith.constant 0 : i32
    return %c0_i32, %c0_i32_0 : i32, i32
  }
  func.func @transform_6(%arg0: i32) -> (i32, i32) {
    %c0_i32 = arith.constant 0 : i32
    %c0_i32_0 = arith.constant 0 : i32
    %c0_i32_1 = arith.constant 0 : i32
    return %c0_i32, %c0_i32_0 : i32, i32
  }
  func.func @transform_7(%arg0: i32) -> (i32, i32) {
    %c0_i32 = arith.constant 0 : i32
    %c0_i32_0 = arith.constant 0 : i32
    %c0_i32_1 = arith.constant 0 : i32
    return %c0_i32, %c0_i32_0 : i32, i32
  }
  func.func @transform_8(%arg0: i32) -> (i32, i32) {
    %c0_i32 = arith.constant 0 : i32
    %c0_i32_0 = arith.constant 0 : i32
    %c0_i32_1 = arith.constant 0 : i32
    return %c0_i32, %c0_i32_0 : i32, i32
  }
  func.func @transform_9(%arg0: i32) -> (i32, i32) {
    %c0_i32 = arith.constant 0 : i32
    %c0_i32_0 = arith.constant 0 : i32
    %c0_i32_1 = arith.constant 0 : i32
    return %c0_i32, %c0_i32_0 : i32, i32
  }
  func.func @transform_10(%arg0: i32) -> (i32, i32) {
    %c0_i32 = arith.constant 0 : i32
    %c0_i32_0 = arith.constant 0 : i32
    %c0_i32_1 = arith.constant 0 : i32
    return %c0_i32, %c0_i32_0 : i32, i32
  }
  func.func @transform_11(%arg0: i32) -> (i32, i32) {
    %c0_i32 = arith.constant 0 : i32
    %c0_i32_0 = arith.constant 0 : i32
    %c0_i32_1 = arith.constant 0 : i32
    return %c0_i32, %c0_i32_0 : i32, i32
  }
  func.func @transform_12(%arg0: i32) -> (i32, i32, i32) {
    %c0_i32 = arith.constant 0 : i32
    %c0_i32_0 = arith.constant 0 : i32
    %c0_i32_1 = arith.constant 0 : i32
    return %arg0, %c0_i32, %c0_i32_0 : i32, i32, i32
  }
}

</mosaic_0001>

<llo_original>
// kernel: tpu_custom_call.1
$region0: #{tpu_custom_call.1}
  #allocation0 [shape = 'u32[]', space=smem, size = 0x4, offset = 0x4, fixed_abs, tag = 'smem constant byte address 0x4 - core index']
  #allocation1 [shape = 'u32[144,128]{1,0:T(1,128)}', space=vmem, size = 0x12000, scoped, tag = 'internal scratch']
  %s0 = inlined_call_operand.hbm [shape: f32[2,16,128], index: 0, kind: input, shape index: {}]
  %s1 = inlined_call_operand.hbm [shape: f32[16,32], index: 1, kind: input, shape index: {}]
  %s2 = inlined_call_operand.hbm [shape: f32[16,32], index: 2, kind: input, shape index: {}]
  %s3 = inlined_call_operand.hbm [shape: bf16[128,128], index: 3, kind: input, shape index: {}]
  %s4 = inlined_call_operand.hbm [shape: bf16[128,128], index: 4, kind: input, shape index: {}]
  %s5 = inlined_call_operand.hbm [shape: bf16[128,128], index: 5, kind: input, shape index: {}]
  %s6 = inlined_call_operand.hbm [shape: bf16[128,128], index: 6, kind: input, shape index: {}]
  %s7 = inlined_call_operand.hbm [shape: bf16[128,384], index: 7, kind: input, shape index: {}]
  %s8 = inlined_call_operand.hbm [shape: bf16[384,128], index: 8, kind: input, shape index: {}]
  %s9 = inlined_call_operand.hbm [shape: bf16[128,384], index: 9, kind: input, shape index: {}]
  %s10 = inlined_call_operand.vmem [shape: f32[1,128], index: 10, kind: input, shape index: {}]
  %s11 = inlined_call_operand.vmem [shape: f32[1,128], index: 11, kind: input, shape index: {}]
  %s12 = inlined_call_operand.hbm [shape: f32[2,16,128], index: 12, kind: output, shape index: {}]
  %s13 = sld [smem:[#allocation0]]
  $region121: #{tpu_custom_call.1} parent=0
    _
  %s15 = ssub.s32 1, %s13
  %s16 = scalar_select 0, %s15, %s13
  $region1: #{tpu_custom_call.1} parent=0
    #allocation2 [shape = 'u8[16384]{0}', space=vmem, size = 0x4000, scoped, tag = 'input window, operand 0']
    #allocation3 [shape = 's32[2]{0}', space=sflag, size = 0x8, scoped, tag = 'scoped memory for tpu_custom_call.1']
    #allocation4 [shape = 's32[2]{0}', space=sflag, size = 0x8, scoped, tag = 'scoped memory for tpu_custom_call.1']
    #allocation5 [shape = 'u8[8192]{0}', space=vmem, size = 0x2000, scoped, tag = 'input window, operand 1, single buffered']
    #allocation6 [shape = 's32[1]{0}', space=sflag, size = 0x4, scoped, tag = 'scoped memory for tpu_custom_call.1']
    #allocation7 [shape = 'u8[8192]{0}', space=vmem, size = 0x2000, scoped, tag = 'input window, operand 2, single buffered']
    #allocation8 [shape = 'u8[32768]{0}', space=vmem, size = 0x8000, scoped, tag = 'input window, operand 3, single buffered']
    #allocation9 [shape = 's32[1]{0}', space=sflag, size = 0x4, scoped, tag = 'scoped memory for tpu_custom_call.1']
    #allocation10 [shape = 'u8[32768]{0}', space=vmem, size = 0x8000, scoped, tag = 'input window, operand 4, single buffered']
    #allocation11 [shape = 'u8[32768]{0}', space=vmem, size = 0x8000, scoped, tag = 'input window, operand 5, single buffered']
    #allocation12 [shape = 's32[1]{0}', space=sflag, size = 0x4, scoped, tag = 'scoped memory for tpu_custom_call.1']
    #allocation13 [shape = 'u8[32768]{0}', space=vmem, size = 0x8000, scoped, tag = 'input window, operand 6, single buffered']
    #allocation14 [shape = 'u8[98304]{0}', space=vmem, size = 0x18000, scoped, tag = 'input window, operand 7, single buffered']
    #allocation15 [shape = 's32[1]{0}', space=sflag, size = 0x4, scoped, tag = 'scoped memory for tpu_custom_call.1']
    #allocation16 [shape = 'u8[98304]{0}', space=vmem, size = 0x18000, scoped, tag = 'input window, operand 8, single buffered']
    #allocation17 [shape = 'u8[98304]{0}', space=vmem, size = 0x18000, scoped, tag = 'input window, operand 9, single buffered']
    #allocation18 [shape = 's32[1]{0}', space=sflag, size = 0x4, scoped, tag = 'scoped memory for tpu_custom_call.1']
    #allocation19 [shape = 'u8[16384]{0}', space=vmem, size = 0x4000, scoped, tag = 'output window, operand 0']
    %17 = vsyncpa [#allocation3], 0
    %s18 = scalar_lea.sflag [#allocation3], 1
    %19 = vsyncpa %s18, 0
    %20 = vsyncpa [#allocation6], 0
    %21 = vsyncpa [#allocation9], 0
    %22 = vsyncpa [#allocation12], 0
    %23 = vsyncpa [#allocation15], 0
    %24 = vsyncpa [#allocation18], 0
    %25 = vsyncpa [#allocation4], 0
    %s26 = scalar_lea.sflag [#allocation4], 1
    %27 = vsyncpa %s26, 0
    loop: start=0, step=1, limit=4
    $region2: #{tpu_custom_call.1} parent=1 // loop_pre_header
      _
    $region3: #{tpu_custom_call.1} parent=1 // loop_header
      %s29 = sphi 0, %s33
      %p30 = scmp.ge.s32.totalorder %s29, 4
      %s39 = sphi 0, %s41
      %s42 = sphi 0, %s39
      %s43 = sphi 0, %s42
      %s59 = sphi 0, %s43
      %s63 = sphi 0, %s63
      %s65 = sphi 0, %s63
      %s66 = sphi 0, %s65
      %s80 = sphi 0, %s66
      %s84 = sphi 0, %s84
      %s86 = sphi 0, %s84
      %s87 = sphi 0, %s86
      %s101 = sphi 0, %s87
      %s105 = sphi 0, %s105
      %s107 = sphi 0, %s105
      %s108 = sphi 0, %s107
      %s122 = sphi 0, %s108
      %s126 = sphi 0, %s126
      %s128 = sphi 0, %s126
      %s129 = sphi 0, %s128
      %s143 = sphi 0, %s129
      %s147 = sphi 0, %s147
      %s149 = sphi 0, %s147
      %s150 = sphi 0, %s149
      %s164 = sphi 0, %s150
      %s168 = sphi 0, %s168
      %s170 = sphi 0, %s168
      %s171 = sphi 0, %s170
      %s185 = sphi 0, %s171
      %s189 = sphi 0, %s189
      %s191 = sphi 0, %s189
      %s192 = sphi 0, %s191
      %s206 = sphi 0, %s192
      %s210 = sphi 0, %s210
      %s212 = sphi 0, %s210
      %s213 = sphi 0, %s212
      %s227 = sphi 0, %s213
      %s231 = sphi 0, %s231
      %s233 = sphi 0, %s231
      %s234 = sphi 0, %s233
      %s248 = sphi 0, %s234
      %s252 = sphi 0, %s252
      %s254 = sphi 0, %s252
      %s255 = sphi 0, %s254
      %s269 = sphi 0, %s255
      %s273 = sphi 0, %s273
      %s275 = sphi 0, %s273
      %s276 = sphi 0, %s275
      %s290 = sphi 0, %s276
      %s296 = sphi 0, %s298
      %s299 = sphi 0, %s296
      %s300 = sphi 0, %s299
      %s316 = sphi 0, %s300
    $region4: #{tpu_custom_call.1} parent=1 // loop_header_branch
      %32 = sbr.rel (%p30) target = $region8
    $region5: #{tpu_custom_call.1} parent=1 // loop_body
      %s34 = ssub.s32 %s29, 1
      %s35 = ssub.s32 %s29, 2
      %s36 = sadd.s32 %s29, 1
      %s37 = ssub.s32 %s29, %s36
      %p38 = scmp.eq.s32.totalorder %s37, 0
      %s40 = sadd.s32 %s39, 1
      %s41 = scalar_select %p38, %s39, %s40
      %p44 = pneg %p38
      %p45 = scmp.eq.s32.totalorder %s29, 1
      %p46 = por %p44, %p45
      %p47 = scmp.ne.s32.totalorder %s39, %s42
      %p48 = scmp.eq.s32.totalorder %s29, 0
      %p49 = por %p47, %p48
      %p50 = scmp.ne.s32.totalorder %s39, %s42
      %p51 = scmp.eq.s32.totalorder %s34, 1
      %p52 = por %p50, %p51
      %p53 = scmp.ne.s32.totalorder %s42, %s43
      %p54 = scmp.eq.s32.totalorder %s34, 0
      %p55 = por %p53, %p54
      %p56 = scmp.ne.s32.totalorder %s42, %s43
      %p57 = scmp.eq.s32.totalorder %s35, 1
      %p58 = por %p56, %p57
      %p60 = scmp.ne.s32.totalorder %s43, %s59
      %p61 = scmp.eq.s32.totalorder %s35, 0
      %p62 = por %p60, %p61
      %s64 = sadd.s32 %s63, 1
      %p67 = scmp.eq.s32.totalorder %s29, 1
      %p68 = scmp.ne.s32.totalorder %s63, %s65
      %p69 = scmp.eq.s32.totalorder %s29, 0
      %p70 = por %p68, %p69
      %p71 = scmp.ne.s32.totalorder %s63, %s65
      %p72 = scmp.eq.s32.totalorder %s34, 1
      %p73 = por %p71, %p72
      %p74 = scmp.ne.s32.totalorder %s65, %s66
      %p75 = scmp.eq.s32.totalorder %s34, 0
      %p76 = por %p74, %p75
      %p77 = scmp.ne.s32.totalorder %s65, %s66
      %p78 = scmp.eq.s32.totalorder %s35, 1
      %p79 = por %p77, %p78
      %p81 = scmp.ne.s32.totalorder %s66, %s80
      %p82 = scmp.eq.s32.totalorder %s35, 0
      %p83 = por %p81, %p82
      %s85 = sadd.s32 %s84, 1
      %p88 = scmp.eq.s32.totalorder %s29, 1
      %p89 = scmp.ne.s32.totalorder %s84, %s86
      %p90 = scmp.eq.s32.totalorder %s29, 0
      %p91 = por %p89, %p90
      %p92 = scmp.ne.s32.totalorder %s84, %s86
      %p93 = scmp.eq.s32.totalorder %s34, 1
      %p94 = por %p92, %p93
      %p95 = scmp.ne.s32.totalorder %s86, %s87
      %p96 = scmp.eq.s32.totalorder %s34, 0
      %p97 = por %p95, %p96
      %p98 = scmp.ne.s32.totalorder %s86, %s87
      %p99 = scmp.eq.s32.totalorder %s35, 1
      %p100 = por %p98, %p99
      %p102 = scmp.ne.s32.totalorder %s87, %s101
      %p103 = scmp.eq.s32.totalorder %s35, 0
      %p104 = por %p102, %p103
      %s106 = sadd.s32 %s105, 1
      %p109 = scmp.eq.s32.totalorder %s29, 1
      %p110 = scmp.ne.s32.totalorder %s105, %s107
      %p111 = scmp.eq.s32.totalorder %s29, 0
      %p112 = por %p110, %p111
      %p113 = scmp.ne.s32.totalorder %s105, %s107
      %p114 = scmp.eq.s32.totalorder %s34, 1
      %p115 = por %p113, %p114
      %p116 = scmp.ne.s32.totalorder %s107, %s108
      %p117 = scmp.eq.s32.totalorder %s34, 0
      %p118 = por %p116, %p117
      %p119 = scmp.ne.s32.totalorder %s107, %s108
      %p120 = scmp.eq.s32.totalorder %s35, 1
      %p121 = por %p119, %p120
      %p123 = scmp.ne.s32.totalorder %s108, %s122
      %p124 = scmp.eq.s32.totalorder %s35, 0
      %p125 = por %p123, %p124
      %s127 = sadd.s32 %s126, 1
      %p130 = scmp.eq.s32.totalorder %s29, 1
      %p131 = scmp.ne.s32.totalorder %s126, %s128
      %p132 = scmp.eq.s32.totalorder %s29, 0
      %p133 = por %p131, %p132
      %p134 = scmp.ne.s32.totalorder %s126, %s128
      %p135 = scmp.eq.s32.totalorder %s34, 1
      %p136 = por %p134, %p135
      %p137 = scmp.ne.s32.totalorder %s128, %s129
      %p138 = scmp.eq.s32.totalorder %s34, 0
      %p139 = por %p137, %p138
      %p140 = scmp.ne.s32.totalorder %s128, %s129
      %p141 = scmp.eq.s32.totalorder %s35, 1
      %p142 = por %p140, %p141
      %p144 = scmp.ne.s32.totalorder %s129, %s143
      %p145 = scmp.eq.s32.totalorder %s35, 0
      %p146 = por %p144, %p145
      %s148 = sadd.s32 %s147, 1
      %p151 = scmp.eq.s32.totalorder %s29, 1
      %p152 = scmp.ne.s32.totalorder %s147, %s149
      %p153 = scmp.eq.s32.totalorder %s29, 0
      %p154 = por %p152, %p153
      %p155 = scmp.ne.s32.totalorder %s147, %s149
      %p156 = scmp.eq.s32.totalorder %s34, 1
      %p157 = por %p155, %p156
      %p158 = scmp.ne.s32.totalorder %s149, %s150
      %p159 = scmp.eq.s32.totalorder %s34, 0
      %p160 = por %p158, %p159
      %p161 = scmp.ne.s32.totalorder %s149, %s150
      %p162 = scmp.eq.s32.totalorder %s35, 1
      %p163 = por %p161, %p162
      %p165 = scmp.ne.s32.totalorder %s150, %s164
      %p166 = scmp.eq.s32.totalorder %s35, 0
      %p167 = por %p165, %p166
      %s169 = sadd.s32 %s168, 1
      %p172 = scmp.eq.s32.totalorder %s29, 1
      %p173 = scmp.ne.s32.totalorder %s168, %s170
      %p174 = scmp.eq.s32.totalorder %s29, 0
      %p175 = por %p173, %p174
      %p176 = scmp.ne.s32.totalorder %s168, %s170
      %p177 = scmp.eq.s32.totalorder %s34, 1
      %p178 = por %p176, %p177
      %p179 = scmp.ne.s32.totalorder %s170, %s171
      %p180 = scmp.eq.s32.totalorder %s34, 0
      %p181 = por %p179, %p180
      %p182 = scmp.ne.s32.totalorder %s170, %s171
      %p183 = scmp.eq.s32.totalorder %s35, 1
      %p184 = por %p182, %p183
      %p186 = scmp.ne.s32.totalorder %s171, %s185
      %p187 = scmp.eq.s32.totalorder %s35, 0
      %p188 = por %p186, %p187
      %s190 = sadd.s32 %s189, 1
      %p193 = scmp.eq.s32.totalorder %s29, 1
      %p194 = scmp.ne.s32.totalorder %s189, %s191
      %p195 = scmp.eq.s32.totalorder %s29, 0
      %p196 = por %p194, %p195
      %p197 = scmp.ne.s32.totalorder %s189, %s191
      %p198 = scmp.eq.s32.totalorder %s34, 1
      %p199 = por %p197, %p198
      %p200 = scmp.ne.s32.totalorder %s191, %s192
      %p201 = scmp.eq.s32.totalorder %s34, 0
      %p202 = por %p200, %p201
      %p203 = scmp.ne.s32.totalorder %s191, %s192
      %p204 = scmp.eq.s32.totalorder %s35, 1
      %p205 = por %p203, %p204
      %p207 = scmp.ne.s32.totalorder %s192, %s206
      %p208 = scmp.eq.s32.totalorder %s35, 0
      %p209 = por %p207, %p208
      %s211 = sadd.s32 %s210, 1
      %p214 = scmp.eq.s32.totalorder %s29, 1
      %p215 = scmp.ne.s32.totalorder %s210, %s212
      %p216 = scmp.eq.s32.totalorder %s29, 0
      %p217 = por %p215, %p216
      %p218 = scmp.ne.s32.totalorder %s210, %s212
      %p219 = scmp.eq.s32.totalorder %s34, 1
      %p220 = por %p218, %p219
      %p221 = scmp.ne.s32.totalorder %s212, %s213
      %p222 = scmp.eq.s32.totalorder %s34, 0
      %p223 = por %p221, %p222
      %p224 = scmp.ne.s32.totalorder %s212, %s213
      %p225 = scmp.eq.s32.totalorder %s35, 1
      %p226 = por %p224, %p225
      %p228 = scmp.ne.s32.totalorder %s213, %s227
      %p229 = scmp.eq.s32.totalorder %s35, 0
      %p230 = por %p228, %p229
      %s232 = sadd.s32 %s231, 1
      %p235 = scmp.eq.s32.totalorder %s29, 1
      %p236 = scmp.ne.s32.totalorder %s231, %s233
      %p237 = scmp.eq.s32.totalorder %s29, 0
      %p238 = por %p236, %p237
      %p239 = scmp.ne.s32.totalorder %s231, %s233
      %p240 = scmp.eq.s32.totalorder %s34, 1
      %p241 = por %p239, %p240
      %p242 = scmp.ne.s32.totalorder %s233, %s234
      %p243 = scmp.eq.s32.totalorder %s34, 0
      %p244 = por %p242, %p243
      %p245 = scmp.ne.s32.totalorder %s233, %s234
      %p246 = scmp.eq.s32.totalorder %s35, 1
      %p247 = por %p245, %p246
      %p249 = scmp.ne.s32.totalorder %s234, %s248
      %p250 = scmp.eq.s32.totalorder %s35, 0
      %p251 = por %p249, %p250
      %s253 = sadd.s32 %s252, 1
      %p256 = scmp.eq.s32.totalorder %s29, 1
      %p257 = scmp.ne.s32.totalorder %s252, %s254
      %p258 = scmp.eq.s32.totalorder %s29, 0
      %p259 = por %p257, %p258
      %p260 = scmp.ne.s32.totalorder %s252, %s254
      %p261 = scmp.eq.s32.totalorder %s34, 1
      %p262 = por %p260, %p261
      %p263 = scmp.ne.s32.totalorder %s254, %s255
      %p264 = scmp.eq.s32.totalorder %s34, 0
      %p265 = por %p263, %p264
      %p266 = scmp.ne.s32.totalorder %s254, %s255
      %p267 = scmp.eq.s32.totalorder %s35, 1
      %p268 = por %p266, %p267
      %p270 = scmp.ne.s32.totalorder %s255, %s269
      %p271 = scmp.eq.s32.totalorder %s35, 0
      %p272 = por %p270, %p271
      %s274 = sadd.s32 %s273, 1
      %p277 = scmp.eq.s32.totalorder %s29, 1
      %p278 = scmp.ne.s32.totalorder %s273, %s275
      %p279 = scmp.eq.s32.totalorder %s29, 0
      %p280 = por %p278, %p279
      %p281 = scmp.ne.s32.totalorder %s273, %s275
      %p282 = scmp.eq.s32.totalorder %s34, 1
      %p283 = por %p281, %p282
      %p284 = scmp.ne.s32.totalorder %s275, %s276
      %p285 = scmp.eq.s32.totalorder %s34, 0
      %p286 = por %p284, %p285
      %p287 = scmp.ne.s32.totalorder %s275, %s276
      %p288 = scmp.eq.s32.totalorder %s35, 1
      %p289 = por %p287, %p288
      %p291 = scmp.ne.s32.totalorder %s276, %s290
      %p292 = scmp.eq.s32.totalorder %s35, 0
      %p293 = por %p291, %p292
      %s294 = ssub.s32 %s29, %s36
      %p295 = scmp.eq.s32.totalorder %s294, 0
      %s297 = sadd.s32 %s296, 1
      %s298 = scalar_select %p295, %s296, %s297
      %p301 = pneg %p295
      %p302 = scmp.eq.s32.totalorder %s29, 1
      %p303 = por %p301, %p302
      %p304 = scmp.ne.s32.totalorder %s296, %s299
      %p305 = scmp.eq.s32.totalorder %s29, 0
      %p306 = por %p304, %p305
      %p307 = scmp.ne.s32.totalorder %s296, %s299
      %p308 = scmp.eq.s32.totalorder %s34, 1
      %p309 = por %p307, %p308
      %p310 = scmp.ne.s32.totalorder %s299, %s300
      %p311 = scmp.eq.s32.totalorder %s34, 0
      %p312 = por %p310, %p311
      %p313 = scmp.ne.s32.totalorder %s299, %s300
      %p314 = scmp.eq.s32.totalorder %s35, 1
      %p315 = por %p313, %p314
      %p317 = scmp.ne.s32.totalorder %s300, %s316
      %p318 = scmp.eq.s32.totalorder %s35, 0
      %p319 = por %p317, %p318
      %p320 = scmp.le.s32.totalorder 1, %s29
      %p321 = scmp.lt.s32.totalorder %s29, 3
      %p322 = pnand %p320, %p321
      %p323 = pneg %p322
      // Predicated region
      $region9: #{tpu_custom_call.1} parent=5 // pred_check
        _
      $region10: #{tpu_custom_call.1} parent=5 // pred_check_branch
        %325 = sbr.rel (%p322) target = $region12
      $region11: #{tpu_custom_call.1} parent=5 // pred_region
        %s326 = ssub.s32 %s29, 1
        // Predicated region
        $region13: #{tpu_custom_call.1} parent=11 // pred_check
          %p327 = pneg %p76
        $region14: #{tpu_custom_call.1} parent=11 // pred_check_branch
          %329 = sbr.rel (%p327) target = $region16
        $region15: #{tpu_custom_call.1} parent=11 // pred_region
          %s331 = ssub.s32 256, 256
          %332 = vsyncadd [#allocation6], %s331
          %s333 = sshll.u32 [#allocation5], 4
          %s334 = int_to_ptr.vmem [resolvable:$true] %s333
          %339 = dma.hbm_to_vmem [thread:$0]  %s1, 256, %s334, [#allocation6], 128, 128, 8
        $region16: #{tpu_custom_call.1} parent=11 // pred_fallthru
          _
        // Predicated region
        $region17: #{tpu_custom_call.1} parent=11 // pred_check
          %p340 = pneg %p97
        $region18: #{tpu_custom_call.1} parent=11 // pred_check_branch
          %342 = sbr.rel (%p340) target = $region20
        $region19: #{tpu_custom_call.1} parent=11 // pred_region
          %s344 = ssub.s32 256, 256
          %345 = vsyncadd [#allocation6], %s344
          %s346 = sshll.u32 [#allocation7], 4
          %s347 = int_to_ptr.vmem [resolvable:$true] %s346
          %352 = dma.hbm_to_vmem [thread:$0]  %s2, 256, %s347, [#allocation6], 128, 128, 8
        $region20: #{tpu_custom_call.1} parent=11 // pred_fallthru
          _
        // Predicated region
        $region21: #{tpu_custom_call.1} parent=11 // pred_check
          %p353 = pneg %p118
        $region22: #{tpu_custom_call.1} parent=11 // pred_check_branch
          %355 = sbr.rel (%p353) target = $region24
        $region23: #{tpu_custom_call.1} parent=11 // pred_region
          %s357 = ssub.s32 1024, 1024
          %358 = vsyncadd [#allocation9], %s357
          %s359 = sshll.u32 [#allocation8], 4
          %s360 = int_to_ptr.vmem [resolvable:$true] %s359
          %365 = dma.hbm_to_vmem [thread:$0]  %s3, 1024, %s360, [#allocation9], 64, 64, 4
        $region24: #{tpu_custom_call.1} parent=11 // pred_fallthru
          _
        // Predicated region
        $region25: #{tpu_custom_call.1} parent=11 // pred_check
          %p366 = pneg %p139
        $region26: #{tpu_custom_call.1} parent=11 // pred_check_branch
          %368 = sbr.rel (%p366) target = $region28
        $region27: #{tpu_custom_call.1} parent=11 // pred_region
          %s370 = ssub.s32 1024, 1024
          %371 = vsyncadd [#allocation9], %s370
          %s372 = sshll.u32 [#allocation10], 4
          %s373 = int_to_ptr.vmem [resolvable:$true] %s372
          %378 = dma.hbm_to_vmem [thread:$0]  %s4, 1024, %s373, [#allocation9], 64, 64, 4
        $region28: #{tpu_custom_call.1} parent=11 // pred_fallthru
          _
        // Predicated region
        $region29: #{tpu_custom_call.1} parent=11 // pred_check
          %p379 = pneg %p160
        $region30: #{tpu_custom_call.1} parent=11 // pred_check_branch
          %381 = sbr.rel (%p379) target = $region32
        $region31: #{tpu_custom_call.1} parent=11 // pred_region
          %s383 = ssub.s32 1024, 1024
          %384 = vsyncadd [#allocation12], %s383
          %s385 = sshll.u32 [#allocation11], 4
          %s386 = int_to_ptr.vmem [resolvable:$true] %s385
          %391 = dma.hbm_to_vmem [thread:$0]  %s5, 1024, %s386, [#allocation12], 64, 64, 4
        $region32: #{tpu_custom_call.1} parent=11 // pred_fallthru
          _
        // Predicated region
        $region33: #{tpu_custom_call.1} parent=11 // pred_check
          %p392 = pneg %p181
        $region34: #{tpu_custom_call.1} parent=11 // pred_check_branch
          %394 = sbr.rel (%p392) target = $region36
        $region35: #{tpu_custom_call.1} parent=11 // pred_region
          %s396 = ssub.s32 1024, 1024
          %397 = vsyncadd [#allocation12], %s396
          %s398 = sshll.u32 [#allocation13], 4
          %s399 = int_to_ptr.vmem [resolvable:$true] %s398
          %404 = dma.hbm_to_vmem [thread:$0]  %s6, 1024, %s399, [#allocation12], 64, 64, 4
        $region36: #{tpu_custom_call.1} parent=11 // pred_fallthru
          _
        // Predicated region
        $region37: #{tpu_custom_call.1} parent=11 // pred_check
          %p405 = pneg %p202
        $region38: #{tpu_custom_call.1} parent=11 // pred_check_branch
          %407 = sbr.rel (%p405) target = $region40
        $region39: #{tpu_custom_call.1} parent=11 // pred_region
          %s409 = ssub.s32 3072, 3072
          %410 = vsyncadd [#allocation15], %s409
          %s411 = sshll.u32 [#allocation14], 4
          %s412 = int_to_ptr.vmem [resolvable:$true] %s411
          %417 = dma.hbm_to_vmem [thread:$0]  %s7, 3072, %s412, [#allocation15], 192, 192, 12
        $region40: #{tpu_custom_call.1} parent=11 // pred_fallthru
          _
        // Predicated region
        $region41: #{tpu_custom_call.1} parent=11 // pred_check
          %p418 = pneg %p223
        $region42: #{tpu_custom_call.1} parent=11 // pred_check_branch
          %420 = sbr.rel (%p418) target = $region44
        $region43: #{tpu_custom_call.1} parent=11 // pred_region
          %s422 = ssub.s32 3072, 3072
          %423 = vsyncadd [#allocation15], %s422
          %s424 = sshll.u32 [#allocation16], 4
          %s425 = int_to_ptr.vmem [resolvable:$true] %s424
          %430 = dma.hbm_to_vmem [thread:$0]  %s8, 3072, %s425, [#allocation15], 64, 64, 4
        $region44: #{tpu_custom_call.1} parent=11 // pred_fallthru
          _
        // Predicated region
        $region45: #{tpu_custom_call.1} parent=11 // pred_check
          %p431 = pneg %p244
        $region46: #{tpu_custom_call.1} parent=11 // pred_check_branch
          %433 = sbr.rel (%p431) target = $region48
        $region47: #{tpu_custom_call.1} parent=11 // pred_region
          %s435 = ssub.s32 3072, 3072
          %436 = vsyncadd [#allocation18], %s435
          %s437 = sshll.u32 [#allocation17], 4
          %s438 = int_to_ptr.vmem [resolvable:$true] %s437
          %443 = dma.hbm_to_vmem [thread:$0]  %s9, 3072, %s438, [#allocation18], 192, 192, 12
        $region48: #{tpu_custom_call.1} parent=11 // pred_fallthru
          _
        // Predicated region
        $region49: #{tpu_custom_call.1} parent=11 // pred_check
          %p444 = pneg %p265
        $region50: #{tpu_custom_call.1} parent=11 // pred_check_branch
          %446 = sbr.rel (%p444) target = $region52
        $region51: #{tpu_custom_call.1} parent=11 // pred_region
          _
        $region52: #{tpu_custom_call.1} parent=11 // pred_fallthru
          _
        // Predicated region
        $region53: #{tpu_custom_call.1} parent=11 // pred_check
          %p447 = pneg %p286
        $region54: #{tpu_custom_call.1} parent=11 // pred_check_branch
          %449 = sbr.rel (%p447) target = $region56
        $region55: #{tpu_custom_call.1} parent=11 // pred_region
          _
        $region56: #{tpu_custom_call.1} parent=11 // pred_fallthru
          _
      $region12: #{tpu_custom_call.1} parent=5 // pred_fallthru
        _
      %p450 = scmp.lt.s32.totalorder %s29, 2
      // Predicated region
      $region57: #{tpu_custom_call.1} parent=5 // pred_check
        %p451 = pneg %p450
      $region58: #{tpu_custom_call.1} parent=5 // pred_check_branch
        %453 = sbr.rel (%p451) target = $region60
      $region59: #{tpu_custom_call.1} parent=5 // pred_region
        // Predicated region
        $region61: #{tpu_custom_call.1} parent=59 // pred_check
          %p454 = pneg %p49
        $region62: #{tpu_custom_call.1} parent=59 // pred_check_branch
          %456 = sbr.rel (%p454) target = $region64
        $region63: #{tpu_custom_call.1} parent=59 // pred_region
          %s457 = sand.u32 %s39, 1
          %s458 = scalar_lea.sflag [#allocation3], %s457
          %s459 = sand.u32 %s39, 1
          %s460 = smul.addr %s459, 16
          %s461 = scalar_lea.vmem [#allocation2], %s460
          %s463 = ssub.s32 256, 256
          %464 = vsyncadd %s458, %s463
          %s465 = smul.addr %s29, 2
          %s466 = smul.addr %s465, 128
          %s467 = scalar_lea.hbm %s0, %s466
          %s468 = sshll.u32 %s461, 4
          %s469 = int_to_ptr.vmem [resolvable:$true] %s468
          %474 = dma.hbm_to_vmem [thread:$0]  %s467, 256, %s469, %s458, 128, 128, 8
        $region64: #{tpu_custom_call.1} parent=59 // pred_fallthru
          _
      $region60: #{tpu_custom_call.1} parent=5 // pred_fallthru
        _
      %p475 = scmp.le.s32.totalorder 1, %s29
      %p476 = scmp.lt.s32.totalorder %s29, 3
      %p477 = pnand %p475, %p476
      %p478 = pneg %p477
      // Predicated region
      $region65: #{tpu_custom_call.1} parent=5 // pred_check
        _
      $region66: #{tpu_custom_call.1} parent=5 // pred_check_branch
        %480 = sbr.rel (%p477) target = $region68
      $region67: #{tpu_custom_call.1} parent=5 // pred_region
        %s481 = ssub.s32 %s29, 1
        %s482 = sand.u32 %s42, 1
        %s483 = scalar_lea.sflag [#allocation3], %s482
        %s484 = sand.u32 %s42, 1
        %s485 = smul.addr %s484, 16
        %s486 = scalar_lea.vmem [#allocation2], %s485
        // Predicated region
        $region69: #{tpu_custom_call.1} parent=67 // pred_check
          %p487 = pneg %p55
        $region70: #{tpu_custom_call.1} parent=67 // pred_check_branch
          %489 = sbr.rel (%p487) target = $region72
        $region71: #{tpu_custom_call.1} parent=67 // pred_region
          %490 = dma.done %s483, 256
        $region72: #{tpu_custom_call.1} parent=67 // pred_fallthru
          _
        // Predicated region
        $region73: #{tpu_custom_call.1} parent=67 // pred_check
          %p491 = pneg %p76
        $region74: #{tpu_custom_call.1} parent=67 // pred_check_branch
          %493 = sbr.rel (%p491) target = $region76
        $region75: #{tpu_custom_call.1} parent=67 // pred_region
          %494 = dma.done [#allocation6], 256
        $region76: #{tpu_custom_call.1} parent=67 // pred_fallthru
          _
        // Predicated region
        $region77: #{tpu_custom_call.1} parent=67 // pred_check
          %p495 = pneg %p97
        $region78: #{tpu_custom_call.1} parent=67 // pred_check_branch
          %497 = sbr.rel (%p495) target = $region80
        $region79: #{tpu_custom_call.1} parent=67 // pred_region
          %498 = dma.done [#allocation6], 256
        $region80: #{tpu_custom_call.1} parent=67 // pred_fallthru
          _
        // Predicated region
        $region81: #{tpu_custom_call.1} parent=67 // pred_check
          %p499 = pneg %p118
        $region82: #{tpu_custom_call.1} parent=67 // pred_check_branch
          %501 = sbr.rel (%p499) target = $region84
        $region83: #{tpu_custom_call.1} parent=67 // pred_region
          %502 = dma.done [#allocation9], 1024
        $region84: #{tpu_custom_call.1} parent=67 // pred_fallthru
          _
        // Predicated region
        $region85: #{tpu_custom_call.1} parent=67 // pred_check
          %p503 = pneg %p139
        $region86: #{tpu_custom_call.1} parent=67 // pred_check_branch
          %505 = sbr.rel (%p503) target = $region88
        $region87: #{tpu_custom_call.1} parent=67 // pred_region
          %506 = dma.done [#allocation9], 1024
        $region88: #{tpu_custom_call.1} parent=67 // pred_fallthru
          _
        // Predicated region
        $region89: #{tpu_custom_call.1} parent=67 // pred_check
          %p507 = pneg %p160
        $region90: #{tpu_custom_call.1} parent=67 // pred_check_branch
          %509 = sbr.rel (%p507) target = $region92
        $region91: #{tpu_custom_call.1} parent=67 // pred_region
          %510 = dma.done [#allocation12], 1024
        $region92: #{tpu_custom_call.1} parent=67 // pred_fallthru
          _
        // Predicated region
        $region93: #{tpu_custom_call.1} parent=67 // pred_check
          %p511 = pneg %p181
        $region94: #{tpu_custom_call.1} parent=67 // pred_check_branch
          %513 = sbr.rel (%p511) target = $region96
        $region95: #{tpu_custom_call.1} parent=67 // pred_region
          %514 = dma.done [#allocation12], 1024
        $region96: #{tpu_custom_call.1} parent=67 // pred_fallthru
          _
        // Predicated region
        $region97: #{tpu_custom_call.1} parent=67 // pred_check
          %p515 = pneg %p202
        $region98: #{tpu_custom_call.1} parent=67 // pred_check_branch
          %517 = sbr.rel (%p515) target = $region100
        $region99: #{tpu_custom_call.1} parent=67 // pred_region
          %518 = dma.done [#allocation15], 3072
        $region100: #{tpu_custom_call.1} parent=67 // pred_fallthru
          _
        // Predicated region
        $region101: #{tpu_custom_call.1} parent=67 // pred_check
          %p519 = pneg %p223
        $region102: #{tpu_custom_call.1} parent=67 // pred_check_branch
          %521 = sbr.rel (%p519) target = $region104
        $region103: #{tpu_custom_call.1} parent=67 // pred_region
          %522 = dma.done [#allocation15], 3072
        $region104: #{tpu_custom_call.1} parent=67 // pred_fallthru
          _
        // Predicated region
        $region105: #{tpu_custom_call.1} parent=67 // pred_check
          %p523 = pneg %p244
        $region106: #{tpu_custom_call.1} parent=67 // pred_check_branch
          %525 = sbr.rel (%p523) target = $region108
        $region107: #{tpu_custom_call.1} parent=67 // pred_region
          %526 = dma.done [#allocation18], 3072
        $region108: #{tpu_custom_call.1} parent=67 // pred_fallthru
          _
        %s527 = sand.u32 %s42, 1
        %s528 = scalar_lea.sflag [#allocation3], %s527
        %s529 = sand.u32 %s42, 1
        %s530 = smul.addr %s529, 16
        %s531 = scalar_lea.vmem [#allocation2], %s530
        %p532 = pneg %p55
        %p533 = pneg %p52
        %p534 = pneg %p76
        %p535 = pneg %p73
        %p536 = pneg %p97
        %p537 = pneg %p94
        %p538 = pneg %p118
        %p539 = pneg %p115
        %p540 = pneg %p139
        %p541 = pneg %p136
        %p542 = pneg %p160
        %p543 = pneg %p157
        %p544 = pneg %p181
        %p545 = pneg %p178
        %p546 = pneg %p202
        %p547 = pneg %p199
        %p548 = pneg %p223
        %p549 = pneg %p220
        %p550 = pneg %p244
        %p551 = pneg %p241
        %p552 = pneg %p265
        %p553 = pneg %p262
        %p554 = pneg %p286
        %p555 = pneg %p283
        %p556 = pneg %p312
        %p557 = pneg %p309
        %s558 = sand.u32 %s299, 1
        %s559 = scalar_lea.sflag [#allocation4], %s558
        %s560 = sand.u32 %s299, 1
        %s561 = smul.addr %s560, 16
        %s562 = scalar_lea.vmem [#allocation19], %s561
        %v564 = vld [vmem:[%s486] sm:$0xff]
        %v565 = vld [vmem:[%s486 + $0x8] sm:$0xff]
        %v566 = vld [vmem:[#allocation5] sm:$0xff]
        %v567 = vld [vmem:[#allocation5 + $0x8] sm:$0xff]
        %v568 = vld [vmem:[#allocation7] sm:$0xff]
        %v569 = vld [vmem:[#allocation7 + $0x8] sm:$0xff]
        %v570 = vld [vmem:[%s10] sm:$0x1]
        %v571 = vmul.f32 %v564, %v564
        %v572 = vmul.f32 %v565, %v565
        %573 = vadd.xlane.f32.xlu0 %v571
        %v574 = vpop.xlane.xlu0 %573
        %575 = vadd.xlane.f32.xlu0 %v572
        %v576 = vpop.xlane.xlu0 %575
        %v577 = vrcp.pop 128.0
        %v578 = vmul.f32 %v574, %v577
        %v579 = vmul.f32 %v576, %v577
        %v580 = vadd.f32 %v578, 1e-05
        %v581 = vadd.f32 %v579, 1e-05
        %v582 = vrsqrt.pop %v580
        %v583 = vrsqrt.pop %v581
        %v584 = vmul.f32 %v564, %v582
        %v585 = vmul.f32 %v565, %v583
        %v587 = vlaneseq
        %v588 = vshrl.u32 %v587, 7
        %v589 = vsub.s32 0, %v588
        %v590 = vrot.slane %v570, %v589
        %v592 = vmul.f32 %v584, %v590
        %v593 = vmul.f32 %v585, %v590
        %v594 = vpack.c.bf16 %v593, %v592
        %v595 = vld [vmem:[#allocation8] sm:$0xf]
        %v596 = vld [vmem:[#allocation8 + $0x4] sm:$0xf]
        %v597 = vld [vmem:[#allocation8 + $0x8] sm:$0xf]
        %v598 = vld [vmem:[#allocation8 + $0xc] sm:$0xf]
        %v599 = vld [vmem:[#allocation8 + $0x10] sm:$0xf]
        %v600 = vld [vmem:[#allocation8 + $0x14] sm:$0xf]
        %v601 = vld [vmem:[#allocation8 + $0x18] sm:$0xf]
        %v602 = vld [vmem:[#allocation8 + $0x1c] sm:$0xf]
        %v603 = vld [vmem:[#allocation8 + $0x20] sm:$0xf]
        %v604 = vld [vmem:[#allocation8 + $0x24] sm:$0xf]
        %v605 = vld [vmem:[#allocation8 + $0x28] sm:$0xf]
        %v606 = vld [vmem:[#allocation8 + $0x2c] sm:$0xf]
        %v607 = vld [vmem:[#allocation8 + $0x30] sm:$0xf]
        %v608 = vld [vmem:[#allocation8 + $0x34] sm:$0xf]
        %v609 = vld [vmem:[#allocation8 + $0x38] sm:$0xf]
        %v610 = vld [vmem:[#allocation8 + $0x3c] sm:$0xf]
        %v627 = vunpack.c.l.b16 %v595
        %v628 = vunpack.c.l.b16 %v596
        %v629 = vunpack.c.l.b16 %v597
        %v630 = vunpack.c.l.b16 %v598
        %v631 = vunpack.c.l.b16 %v599
        %v632 = vunpack.c.l.b16 %v600
        %v633 = vunpack.c.l.b16 %v601
        %v634 = vunpack.c.l.b16 %v602
        %v635 = vunpack.c.l.b16 %v603
        %v636 = vunpack.c.l.b16 %v604
        %v637 = vunpack.c.l.b16 %v605
        %v638 = vunpack.c.l.b16 %v606
        %v639 = vunpack.c.l.b16 %v607
        %v640 = vunpack.c.l.b16 %v608
        %v641 = vunpack.c.l.b16 %v609
        %v642 = vunpack.c.l.b16 %v610
        %v643 = vpack.c.b16 %v628, %v627
        %v644 = vpack.c.b16 %v630, %v629
        %v645 = vpack.c.b16 %v632, %v631
        %v646 = vpack.c.b16 %v634, %v633
        %v647 = vpack.c.b16 %v636, %v635
        %v648 = vpack.c.b16 %v638, %v637
        %v649 = vpack.c.b16 %v640, %v639
        %v650 = vpack.c.b16 %v642, %v641
        %659 = vmatprep.subr.bf16.mxu0 0
        %660 = vmatpush1.bf16.msra.mxu0 %v643
        %661 = vmatprep.subr.bf16.mxu0 0
        %662 = vmatpush1.bf16.msra.mxu0 %v644
        %663 = vmatprep.subr.bf16.mxu0 0
        %664 = vmatpush1.bf16.msra.mxu0 %v645
        %665 = vmatprep.subr.bf16.mxu0 0
        %666 = vmatpush1.bf16.msra.mxu0 %v646
        %667 = vmatprep.subr.bf16.mxu0 0
        %668 = vmatpush1.bf16.msra.mxu0 %v647
        %669 = vmatprep.subr.bf16.mxu0 0
        %670 = vmatpush1.bf16.msra.mxu0 %v648
        %671 = vmatprep.subr.bf16.mxu0 0
        %672 = vmatpush1.bf16.msra.mxu0 %v649
        %673 = vmatprep.subr.bf16.mxu0 0
        %674 = vmatpush1.bf16.msra.mxu0 %v650
        %675 = vmatprep.subr.bf16.mxu0 0
        %676 = vmatpush1.bf16.msra.mxu0 0
        %677 = vmatprep.subr.bf16.mxu0 0
        %678 = vmatpush1.bf16.msra.mxu0 0
        %679 = vmatprep.subr.bf16.mxu0 0
        %680 = vmatpush1.bf16.msra.mxu0 0
        %681 = vmatprep.subr.bf16.mxu0 0
        %682 = vmatpush1.bf16.msra.mxu0 0
        %683 = vmatprep.subr.bf16.mxu0 0
        %684 = vmatpush1.bf16.msra.mxu0 0
        %685 = vmatprep.subr.bf16.mxu0 0
        %686 = vmatpush1.bf16.msra.mxu0 0
        %687 = vmatprep.subr.bf16.mxu0 0
        %688 = vmatpush1.bf16.msra.mxu0 0
        %689 = vmatprep.subr.bf16.mxu0 0
        %690 = vmatpush1.bf16.msra.mxu0 0
        %691 = vmatprep.mubr.bf16.mxu0 0
        %692 = vmatmul.mubr.bf16.gmra.mrb[0].mxu0 %v594
        %v693 = vpop.f32.mrb[0].mxu0
        %v694 = vadd.f32 0.0, %v693
        %v695 = vpop.f32.mrb[0].mxu0
        %v696 = vpop.f32.mrb[0].mxu0
        %v697 = vadd.f32 0.0, %v696
        %v698 = vpop.f32.mrb[0].mxu0
        %699 = vdwg.mxu0
        %v700 = vld [vmem:[#allocation10] sm:$0xf]
        %v701 = vld [vmem:[#allocation10 + $0x4] sm:$0xf]
        %v702 = vld [vmem:[#allocation10 + $0x8] sm:$0xf]
        %v703 = vld [vmem:[#allocation10 + $0xc] sm:$0xf]
        %v704 = vld [vmem:[#allocation10 + $0x10] sm:$0xf]
        %v705 = vld [vmem:[#allocation10 + $0x14] sm:$0xf]
        %v706 = vld [vmem:[#allocation10 + $0x18] sm:$0xf]
        %v707 = vld [vmem:[#allocation10 + $0x1c] sm:$0xf]
        %v708 = vld [vmem:[#allocation10 + $0x20] sm:$0xf]
        %v709 = vld [vmem:[#allocation10 + $0x24] sm:$0xf]
        %v710 = vld [vmem:[#allocation10 + $0x28] sm:$0xf]
        %v711 = vld [vmem:[#allocation10 + $0x2c] sm:$0xf]
        %v712 = vld [vmem:[#allocation10 + $0x30] sm:$0xf]
        %v713 = vld [vmem:[#allocation10 + $0x34] sm:$0xf]
        %v714 = vld [vmem:[#allocation10 + $0x38] sm:$0xf]
        %v715 = vld [vmem:[#allocation10 + $0x3c] sm:$0xf]
        %v732 = vunpack.c.l.b16 %v700
        %v733 = vunpack.c.l.b16 %v701
        %v734 = vunpack.c.l.b16 %v702
        %v735 = vunpack.c.l.b16 %v703
        %v736 = vunpack.c.l.b16 %v704
        %v737 = vunpack.c.l.b16 %v705
        %v738 = vunpack.c.l.b16 %v706
        %v739 = vunpack.c.l.b16 %v707
        %v740 = vunpack.c.l.b16 %v708
        %v741 = vunpack.c.l.b16 %v709
        %v742 = vunpack.c.l.b16 %v710
        %v743 = vunpack.c.l.b16 %v711
        %v744 = vunpack.c.l.b16 %v712
        %v745 = vunpack.c.l.b16 %v713
        %v746 = vunpack.c.l.b16 %v714
        %v747 = vunpack.c.l.b16 %v715
        %v748 = vpack.c.b16 %v733, %v732
        %v749 = vpack.c.b16 %v735, %v734
        %v750 = vpack.c.b16 %v737, %v736
        %v751 = vpack.c.b16 %v739, %v738
        %v752 = vpack.c.b16 %v741, %v740
        %v753 = vpack.c.b16 %v743, %v742
        %v754 = vpack.c.b16 %v745, %v744
        %v755 = vpack.c.b16 %v747, %v746
        %764 = vmatprep.subr.bf16.mxu0 0
        %765 = vmatpush1.bf16.msra.mxu0 %v748
        %766 = vmatprep.subr.bf16.mxu0 0
        %767 = vmatpush1.bf16.msra.mxu0 %v749
        %768 = vmatprep.subr.bf16.mxu0 0
        %769 = vmatpush1.bf16.msra.mxu0 %v750
        %770 = vmatprep.subr.bf16.mxu0 0
        %771 = vmatpush1.bf16.msra.mxu0 %v751
        %772 = vmatprep.subr.bf16.mxu0 0
        %773 = vmatpush1.bf16.msra.mxu0 %v752
        %774 = vmatprep.subr.bf16.mxu0 0
        %775 = vmatpush1.bf16.msra.mxu0 %v753
        %776 = vmatprep.subr.bf16.mxu0 0
        %777 = vmatpush1.bf16.msra.mxu0 %v754
        %778 = vmatprep.subr.bf16.mxu0 0
        %779 = vmatpush1.bf16.msra.mxu0 %v755
        %780 = vmatprep.subr.bf16.mxu0 0
        %781 = vmatpush1.bf16.msra.mxu0 0
        %782 = vmatprep.subr.bf16.mxu0 0
        %783 = vmatpush1.bf16.msra.mxu0 0
        %784 = vmatprep.subr.bf16.mxu0 0
        %785 = vmatpush1.bf16.msra.mxu0 0
        %786 = vmatprep.subr.bf16.mxu0 0
        %787 = vmatpush1.bf16.msra.mxu0 0
        %788 = vmatprep.subr.bf16.mxu0 0
        %789 = vmatpush1.bf16.msra.mxu0 0
        %790 = vmatprep.subr.bf16.mxu0 0
        %791 = vmatpush1.bf16.msra.mxu0 0
        %792 = vmatprep.subr.bf16.mxu0 0
        %793 = vmatpush1.bf16.msra.mxu0 0
        %794 = vmatprep.subr.bf16.mxu0 0
        %795 = vmatpush1.bf16.msra.mxu0 0
        %796 = vmatprep.mubr.bf16.mxu0 0
        %797 = vmatmul.mubr.bf16.gmra.mrb[0].mxu0 %v594
        %v798 = vpop.f32.mrb[0].mxu0
        %v799 = vadd.f32 0.0, %v798
        %v800 = vpop.f32.mrb[0].mxu0
        %v801 = vpop.f32.mrb[0].mxu0
        %v802 = vadd.f32 0.0, %v801
        %v803 = vpop.f32.mrb[0].mxu0
        %804 = vdwg.mxu0
        %v805 = vld [vmem:[#allocation11] sm:$0xf]
        %v806 = vld [vmem:[#allocation11 + $0x4] sm:$0xf]
        %v807 = vld [vmem:[#allocation11 + $0x8] sm:$0xf]
        %v808 = vld [vmem:[#allocation11 + $0xc] sm:$0xf]
        %v809 = vld [vmem:[#allocation11 + $0x10] sm:$0xf]
        %v810 = vld [vmem:[#allocation11 + $0x14] sm:$0xf]
        %v811 = vld [vmem:[#allocation11 + $0x18] sm:$0xf]
        %v812 = vld [vmem:[#allocation11 + $0x1c] sm:$0xf]
        %v813 = vld [vmem:[#allocation11 + $0x20] sm:$0xf]
        %v814 = vld [vmem:[#allocation11 + $0x24] sm:$0xf]
        %v815 = vld [vmem:[#allocation11 + $0x28] sm:$0xf]
        %v816 = vld [vmem:[#allocation11 + $0x2c] sm:$0xf]
        %v817 = vld [vmem:[#allocation11 + $0x30] sm:$0xf]
        %v818 = vld [vmem:[#allocation11 + $0x34] sm:$0xf]
        %v819 = vld [vmem:[#allocation11 + $0x38] sm:$0xf]
        %v820 = vld [vmem:[#allocation11 + $0x3c] sm:$0xf]
        %v837 = vunpack.c.l.b16 %v805
        %v838 = vunpack.c.l.b16 %v806
        %v839 = vunpack.c.l.b16 %v807
        %v840 = vunpack.c.l.b16 %v808
        %v841 = vunpack.c.l.b16 %v809
        %v842 = vunpack.c.l.b16 %v810
        %v843 = vunpack.c.l.b16 %v811
        %v844 = vunpack.c.l.b16 %v812
        %v845 = vunpack.c.l.b16 %v813
        %v846 = vunpack.c.l.b16 %v814
        %v847 = vunpack.c.l.b16 %v815
        %v848 = vunpack.c.l.b16 %v816
        %v849 = vunpack.c.l.b16 %v817
        %v850 = vunpack.c.l.b16 %v818
        %v851 = vunpack.c.l.b16 %v819
        %v852 = vunpack.c.l.b16 %v820
        %v853 = vpack.c.b16 %v838, %v837
        %v854 = vpack.c.b16 %v840, %v839
        %v855 = vpack.c.b16 %v842, %v841
        %v856 = vpack.c.b16 %v844, %v843
        %v857 = vpack.c.b16 %v846, %v845
        %v858 = vpack.c.b16 %v848, %v847
        %v859 = vpack.c.b16 %v850, %v849
        %v860 = vpack.c.b16 %v852, %v851
        %869 = vmatprep.subr.bf16.mxu0 0
        %870 = vmatpush1.bf16.msra.mxu0 %v853
        %871 = vmatprep.subr.bf16.mxu0 0
        %872 = vmatpush1.bf16.msra.mxu0 %v854
        %873 = vmatprep.subr.bf16.mxu0 0
        %874 = vmatpush1.bf16.msra.mxu0 %v855
        %875 = vmatprep.subr.bf16.mxu0 0
        %876 = vmatpush1.bf16.msra.mxu0 %v856
        %877 = vmatprep.subr.bf16.mxu0 0
        %878 = vmatpush1.bf16.msra.mxu0 %v857
        %879 = vmatprep.subr.bf16.mxu0 0
        %880 = vmatpush1.bf16.msra.mxu0 %v858
        %881 = vmatprep.subr.bf16.mxu0 0
        %882 = vmatpush1.bf16.msra.mxu0 %v859
        %883 = vmatprep.subr.bf16.mxu0 0
        %884 = vmatpush1.bf16.msra.mxu0 %v860
        %885 = vmatprep.subr.bf16.mxu0 0
        %886 = vmatpush1.bf16.msra.mxu0 0
        %887 = vmatprep.subr.bf16.mxu0 0
        %888 = vmatpush1.bf16.msra.mxu0 0
        %889 = vmatprep.subr.bf16.mxu0 0
        %890 = vmatpush1.bf16.msra.mxu0 0
        %891 = vmatprep.subr.bf16.mxu0 0
        %892 = vmatpush1.bf16.msra.mxu0 0
        %893 = vmatprep.subr.bf16.mxu0 0
        %894 = vmatpush1.bf16.msra.mxu0 0
        %895 = vmatprep.subr.bf16.mxu0 0
        %896 = vmatpush1.bf16.msra.mxu0 0
        %897 = vmatprep.subr.bf16.mxu0 0
        %898 = vmatpush1.bf16.msra.mxu0 0
        %899 = vmatprep.subr.bf16.mxu0 0
        %900 = vmatpush1.bf16.msra.mxu0 0
        %901 = vmatprep.mubr.bf16.mxu0 0
        %902 = vmatmul.mubr.bf16.gmra.mrb[0].mxu0 %v594
        %v903 = vpop.f32.mrb[0].mxu0
        %v904 = vadd.f32 0.0, %v903
        %v905 = vpop.f32.mrb[0].mxu0
        %v906 = vpop.f32.mrb[0].mxu0
        %v907 = vadd.f32 0.0, %v906
        %v908 = vpop.f32.mrb[0].mxu0
        %909 = vdwg.mxu0
        %v910 = vpack.c.bf16 %v907, %v904
        %v911 = vlaneseq
        %v912 = vshrl.u32 %v911, 7
        %v913 = vadd.s32 %v912, 8
        %v914 = vlaneseq
        %v915 = vand.u32 %v914, 127
        %vm916 = vcmp.ge.s32.totalorder %v912, %v915
        %vm917 = vcmp.ge.s32.totalorder %v913, %v915
        %v918 = vsel %vm916, 0.0, -1e+30
        %v919 = vsel %vm917, 0.0, -1e+30
        %922 = vrot.lane.b32.xlu0 %v694, 112
        %v923 = vpop.permute.xlu0 %922
        %924 = vrot.lane.b32.xlu0 %v697, 112
        %v925 = vpop.permute.xlu0 %924
        %928 = vrot.lane.b32.xlu0 %v694, 16
        %v929 = vpop.permute.xlu0 %928
        %930 = vrot.lane.b32.xlu0 %v697, 16
        %v931 = vpop.permute.xlu0 %930
        %vm934 = vcmask 130048
        %v935 = vsel %vm934, %v923, %v929
        %v936 = vsel %vm934, %v925, %v931
        %v937 = vmul.f32 %v694, %v566
        %v938 = vmul.f32 %v697, %v567
        %v939 = vmul.f32 %v935, %v568
        %v940 = vmul.f32 %v936, %v569
        %v941 = vadd.f32 %v937, %v939
        %v942 = vadd.f32 %v938, %v940
        %v943 = vpack.c.bf16 %v942, %v941
        %946 = vrot.lane.b32.xlu0 %v799, 112
        %v947 = vpop.permute.xlu0 %946
        %948 = vrot.lane.b32.xlu0 %v802, 112
        %v949 = vpop.permute.xlu0 %948
        %952 = vrot.lane.b32.xlu0 %v799, 16
        %v953 = vpop.permute.xlu0 %952
        %954 = vrot.lane.b32.xlu0 %v802, 16
        %v955 = vpop.permute.xlu0 %954
        %v958 = vsel %vm934, %v947, %v953
        %v959 = vsel %vm934, %v949, %v955
        %v960 = vmul.f32 %v799, %v566
        %v961 = vmul.f32 %v802, %v567
        %v962 = vmul.f32 %v958, %v568
        %v963 = vmul.f32 %v959, %v569
        %v964 = vadd.f32 %v960, %v962
        %v965 = vadd.f32 %v961, %v963
        %v966 = vpack.c.bf16 %v965, %v964
        %vm967 = vcmask 261120
        %v969 = vsel %vm967, %v943, 0
        %v972 = vsel %vm967, %v966, 0
        %974 = vmatprep.subr.bf16.mxu0 0
        %975 = vmatpush1.bf16.xpose.msra.mxu0 %v972
        %976 = vmatprep.subr.bf16.mxu0 0
        %977 = vmatpush1.bf16.xpose.msra.mxu0 0
        %978 = vmatprep.subr.bf16.mxu0 0
        %979 = vmatpush1.bf16.xpose.msra.mxu0 0
        %980 = vmatprep.subr.bf16.mxu0 0
        %981 = vmatpush1.bf16.xpose.msra.mxu0 0
        %982 = vmatprep.subr.bf16.mxu0 0
        %983 = vmatpush1.bf16.xpose.msra.mxu0 0
        %984 = vmatprep.subr.bf16.mxu0 0
        %985 = vmatpush1.bf16.xpose.msra.mxu0 0
        %986 = vmatprep.subr.bf16.mxu0 0
        %987 = vmatpush1.bf16.xpose.msra.mxu0 0
        %988 = vmatprep.subr.bf16.mxu0 0
        %989 = vmatpush1.bf16.xpose.msra.mxu0 0
        %990 = vmatprep.subr.bf16.mxu0 0
        %991 = vmatpush1.bf16.xpose.msra.mxu0 0
        %992 = vmatprep.subr.bf16.mxu0 0
        %993 = vmatpush1.bf16.xpose.msra.mxu0 0
        %994 = vmatprep.subr.bf16.mxu0 0
        %995 = vmatpush1.bf16.xpose.msra.mxu0 0
        %996 = vmatprep.subr.bf16.mxu0 0
        %997 = vmatpush1.bf16.xpose.msra.mxu0 0
        %998 = vmatprep.subr.bf16.mxu0 0
        %999 = vmatpush1.bf16.xpose.msra.mxu0 0
        %1000 = vmatprep.subr.bf16.mxu0 0
        %1001 = vmatpush1.bf16.xpose.msra.mxu0 0
        %1002 = vmatprep.subr.bf16.mxu0 0
        %1003 = vmatpush1.bf16.xpose.msra.mxu0 0
        %1004 = vmatprep.subr.bf16.mxu0 0
        %1005 = vmatpush1.bf16.xpose.msra.mxu0 0
        %1006 = vmatprep.mubr.bf16.mxu0 0
        %1007 = vmatmul.mubr.bf16.gmra.mrb[0].mxu0 %v969
        %v1008 = vpop.f32.mrb[0].mxu0
        %v1009 = vadd.f32 %v918, %v1008
        %v1010 = vpop.f32.mrb[0].mxu0
        %v1011 = vpop.f32.mrb[0].mxu0
        %v1012 = vadd.f32 %v919, %v1011
        %v1013 = vpop.f32.mrb[0].mxu0
        %1014 = vdwg.mxu0
        %v1015 = vsel %vm934, %v1009, -inf
        %1016 = vmax.xlane.f32.xlu0 %v1015
        %v1017 = vpop.xlane.xlu0 %1016
        %v1018 = vsel %vm934, %v1012, -inf
        %1019 = vmax.xlane.f32.xlu0 %v1018
        %v1020 = vpop.xlane.xlu0 %1019
        %v1021 = vsub.f32 %v1009, %v1017
        %v1022 = vsub.f32 %v1012, %v1020
        %v1023 = vmul.f32 %v1021, 1.442695
        %v1024 = vpow.pop %v1023
        %v1025 = vmul.f32 %v1022, 1.442695
        %v1026 = vpow.pop %v1025
        %v1027 = vsel %vm934, %v1024, 0.0
        %1028 = vadd.xlane.f32.xlu0 %v1027
        %v1029 = vpop.xlane.xlu0 %1028
        %v1030 = vsel %vm934, %v1026, 0.0
        %1031 = vadd.xlane.f32.xlu0 %v1030
        %v1032 = vpop.xlane.xlu0 %1031
        %v1033 = vrcp.pop %v1029
        %v1034 = vrcp.pop %v1032
        %v1035 = vmul.f32 %v1024, %v1033
        %v1036 = vmul.f32 %v1026, %v1034
        %v1037 = vpack.c.bf16 %v1036, %v1035
        %v1039 = vsel %vm934, %v1037, 0
        %1041 = vmatprep.subr.bf16.mxu0 0
        %1042 = vmatpush1.bf16.msra.mxu0 %v910
        %1043 = vmatprep.subr.bf16.mxu0 0
        %1044 = vmatpush1.bf16.msra.mxu0 0
        %1045 = vmatprep.subr.bf16.mxu0 0
        %1046 = vmatpush1.bf16.msra.mxu0 0
        %1047 = vmatprep.subr.bf16.mxu0 0
        %1048 = vmatpush1.bf16.msra.mxu0 0
        %1049 = vmatprep.subr.bf16.mxu0 0
        %1050 = vmatpush1.bf16.msra.mxu0 0
        %1051 = vmatprep.subr.bf16.mxu0 0
        %1052 = vmatpush1.bf16.msra.mxu0 0
        %1053 = vmatprep.subr.bf16.mxu0 0
        %1054 = vmatpush1.bf16.msra.mxu0 0
        %1055 = vmatprep.subr.bf16.mxu0 0
        %1056 = vmatpush1.bf16.msra.mxu0 0
        %1057 = vmatprep.subr.bf16.mxu0 0
        %1058 = vmatpush1.bf16.msra.mxu0 0
        %1059 = vmatprep.subr.bf16.mxu0 0
        %1060 = vmatpush1.bf16.msra.mxu0 0
        %1061 = vmatprep.subr.bf16.mxu0 0
        %1062 = vmatpush1.bf16.msra.mxu0 0
        %1063 = vmatprep.subr.bf16.mxu0 0
        %1064 = vmatpush1.bf16.msra.mxu0 0
        %1065 = vmatprep.subr.bf16.mxu0 0
        %1066 = vmatpush1.bf16.msra.mxu0 0
        %1067 = vmatprep.subr.bf16.mxu0 0
        %1068 = vmatpush1.bf16.msra.mxu0 0
        %1069 = vmatprep.subr.bf16.mxu0 0
        %1070 = vmatpush1.bf16.msra.mxu0 0
        %1071 = vmatprep.subr.bf16.mxu0 0
        %1072 = vmatpush1.bf16.msra.mxu0 0
        %1073 = vmatprep.mubr.bf16.mxu0 0
        %1074 = vmatmul.mubr.bf16.gmra.mrb[0].mxu0 %v1039
        %v1075 = vpop.f32.mrb[0].mxu0
        %v1076 = vadd.f32 0.0, %v1075
        %v1077 = vpop.f32.mrb[0].mxu0
        %v1078 = vpop.f32.mrb[0].mxu0
        %v1079 = vadd.f32 0.0, %v1078
        %v1080 = vpop.f32.mrb[0].mxu0
        %1081 = vdwg.mxu0
        %1082 = vrot.lane.b32.xlu0 %v694, 80
        %v1083 = vpop.permute.xlu0 %1082
        %1084 = vrot.lane.b32.xlu0 %v697, 80
        %v1085 = vpop.permute.xlu0 %1084
        %v1088 = vsel %vm934, %v1083, %v923
        %v1089 = vsel %vm934, %v1085, %v925
        %1092 = vrot.lane.b32.xlu0 %v566, 32
        %v1093 = vpop.permute.xlu0 %1092
        %1094 = vrot.lane.b32.xlu0 %v567, 32
        %v1095 = vpop.permute.xlu0 %1094
        %v1098 = vmul.f32 %v694, %v1093
        %v1099 = vmul.f32 %v697, %v1095
        %v1100 = vmul.f32 %v1088, %v568
        %v1101 = vmul.f32 %v1089, %v569
        %1104 = vrot.lane.b32.xlu0 %v1100, 32
        %v1105 = vpop.permute.xlu0 %1104
        %1106 = vrot.lane.b32.xlu0 %v1101, 32
        %v1107 = vpop.permute.xlu0 %1106
        %v1110 = vadd.f32 %v1098, %v1105
        %v1111 = vadd.f32 %v1099, %v1107
        %v1112 = vpack.c.bf16 %v1111, %v1110
        %1113 = vrot.lane.b32.xlu0 %v799, 80
        %v1114 = vpop.permute.xlu0 %1113
        %1115 = vrot.lane.b32.xlu0 %v802, 80
        %v1116 = vpop.permute.xlu0 %1115
        %v1119 = vsel %vm934, %v1114, %v947
        %v1120 = vsel %vm934, %v1116, %v949
        %v1121 = vmul.f32 %v799, %v1093
        %v1122 = vmul.f32 %v802, %v1095
        %v1123 = vmul.f32 %v1119, %v568
        %v1124 = vmul.f32 %v1120, %v569
        %1127 = vrot.lane.b32.xlu0 %v1123, 32
        %v1128 = vpop.permute.xlu0 %1127
        %1129 = vrot.lane.b32.xlu0 %v1124, 32
        %v1130 = vpop.permute.xlu0 %1129
        %v1133 = vadd.f32 %v1121, %v1128
        %v1134 = vadd.f32 %v1122, %v1130
        %v1135 = vpack.c.bf16 %v1134, %v1133
        %1137 = vrot.lane.b32.xlu0 %v1112, 96
        %v1138 = vpop.permute.xlu0 %1137
        %1140 = vrot.lane.b32.xlu0 %v1135, 96
        %v1141 = vpop.permute.xlu0 %1140
        %v1143 = vsel %vm967, %v1138, 0
        %v1146 = vsel %vm967, %v1141, 0
        %1148 = vmatprep.subr.bf16.mxu0 0
        %1149 = vmatpush1.bf16.xpose.msra.mxu0 %v1146
        %1150 = vmatprep.subr.bf16.mxu0 0
        %1151 = vmatpush1.bf16.xpose.msra.mxu0 0
        %1152 = vmatprep.subr.bf16.mxu0 0
        %1153 = vmatpush1.bf16.xpose.msra.mxu0 0
        %1154 = vmatprep.subr.bf16.mxu0 0
        %1155 = vmatpush1.bf16.xpose.msra.mxu0 0
        %1156 = vmatprep.subr.bf16.mxu0 0
        %1157 = vmatpush1.bf16.xpose.msra.mxu0 0
        %1158 = vmatprep.subr.bf16.mxu0 0
        %1159 = vmatpush1.bf16.xpose.msra.mxu0 0
        %1160 = vmatprep.subr.bf16.mxu0 0
        %1161 = vmatpush1.bf16.xpose.msra.mxu0 0
        %1162 = vmatprep.subr.bf16.mxu0 0
        %1163 = vmatpush1.bf16.xpose.msra.mxu0 0
        %1164 = vmatprep.subr.bf16.mxu0 0
        %1165 = vmatpush1.bf16.xpose.msra.mxu0 0
        %1166 = vmatprep.subr.bf16.mxu0 0
        %1167 = vmatpush1.bf16.xpose.msra.mxu0 0
        %1168 = vmatprep.subr.bf16.mxu0 0
        %1169 = vmatpush1.bf16.xpose.msra.mxu0 0
        %1170 = vmatprep.subr.bf16.mxu0 0
        %1171 = vmatpush1.bf16.xpose.msra.mxu0 0
        %1172 = vmatprep.subr.bf16.mxu0 0
        %1173 = vmatpush1.bf16.xpose.msra.mxu0 0
        %1174 = vmatprep.subr.bf16.mxu0 0
        %1175 = vmatpush1.bf16.xpose.msra.mxu0 0
        %1176 = vmatprep.subr.bf16.mxu0 0
        %1177 = vmatpush1.bf16.xpose.msra.mxu0 0
        %1178 = vmatprep.subr.bf16.mxu0 0
        %1179 = vmatpush1.bf16.xpose.msra.mxu0 0
        %1180 = vmatprep.mubr.bf16.mxu0 0
        %1181 = vmatmul.mubr.bf16.gmra.mrb[0].mxu0 %v1143
        %v1182 = vpop.f32.mrb[0].mxu0
        %v1183 = vadd.f32 %v918, %v1182
        %v1184 = vpop.f32.mrb[0].mxu0
        %v1185 = vpop.f32.mrb[0].mxu0
        %v1186 = vadd.f32 %v919, %v1185
        %v1187 = vpop.f32.mrb[0].mxu0
        %1188 = vdwg.mxu0
        %v1189 = vsel %vm934, %v1183, -inf
        %1190 = vmax.xlane.f32.xlu0 %v1189
        %v1191 = vpop.xlane.xlu0 %1190
        %v1192 = vsel %vm934, %v1186, -inf
        %1193 = vmax.xlane.f32.xlu0 %v1192
        %v1194 = vpop.xlane.xlu0 %1193
        %v1195 = vsub.f32 %v1183, %v1191
        %v1196 = vsub.f32 %v1186, %v1194
        %v1197 = vmul.f32 %v1195, 1.442695
        %v1198 = vpow.pop %v1197
        %v1199 = vmul.f32 %v1196, 1.442695
        %v1200 = vpow.pop %v1199
        %v1201 = vsel %vm934, %v1198, 0.0
        %1202 = vadd.xlane.f32.xlu0 %v1201
        %v1203 = vpop.xlane.xlu0 %1202
        %v1204 = vsel %vm934, %v1200, 0.0
        %1205 = vadd.xlane.f32.xlu0 %v1204
        %v1206 = vpop.xlane.xlu0 %1205
        %v1207 = vrcp.pop %v1203
        %v1208 = vrcp.pop %v1206
        %v1209 = vmul.f32 %v1198, %v1207
        %v1210 = vmul.f32 %v1200, %v1208
        %v1211 = vpack.c.bf16 %v1210, %v1209
        %1213 = vrot.lane.b32.xlu0 %v910, 96
        %v1214 = vpop.permute.xlu0 %1213
        %v1217 = vsel %vm934, %v1211, 0
        %1219 = vmatprep.subr.bf16.mxu0 0
        %1220 = vmatpush1.bf16.msra.mxu0 %v1214
        %1221 = vmatprep.subr.bf16.mxu0 0
        %1222 = vmatpush1.bf16.msra.mxu0 0
        %1223 = vmatprep.subr.bf16.mxu0 0
        %1224 = vmatpush1.bf16.msra.mxu0 0
        %1225 = vmatprep.subr.bf16.mxu0 0
        %1226 = vmatpush1.bf16.msra.mxu0 0
        %1227 = vmatprep.subr.bf16.mxu0 0
        %1228 = vmatpush1.bf16.msra.mxu0 0
        %1229 = vmatprep.subr.bf16.mxu0 0
        %1230 = vmatpush1.bf16.msra.mxu0 0
        %1231 = vmatprep.subr.bf16.mxu0 0
        %1232 = vmatpush1.bf16.msra.mxu0 0
        %1233 = vmatprep.subr.bf16.mxu0 0
        %1234 = vmatpush1.bf16.msra.mxu0 0
        %1235 = vmatprep.subr.bf16.mxu0 0
        %1236 = vmatpush1.bf16.msra.mxu0 0
        %1237 = vmatprep.subr.bf16.mxu0 0
        %1238 = vmatpush1.bf16.msra.mxu0 0
        %1239 = vmatprep.subr.bf16.mxu0 0
        %1240 = vmatpush1.bf16.msra.mxu0 0
        %1241 = vmatprep.subr.bf16.mxu0 0
        %1242 = vmatpush1.bf16.msra.mxu0 0
        %1243 = vmatprep.subr.bf16.mxu0 0
        %1244 = vmatpush1.bf16.msra.mxu0 0
        %1245 = vmatprep.subr.bf16.mxu0 0
        %1246 = vmatpush1.bf16.msra.mxu0 0
        %1247 = vmatprep.subr.bf16.mxu0 0
        %1248 = vmatpush1.bf16.msra.mxu0 0
        %1249 = vmatprep.subr.bf16.mxu0 0
        %1250 = vmatpush1.bf16.msra.mxu0 0
        %1251 = vmatprep.mubr.bf16.mxu0 0
        %1252 = vmatmul.mubr.bf16.gmra.mrb[0].mxu0 %v1217
        %v1253 = vpop.f32.mrb[0].mxu0
        %v1254 = vadd.f32 0.0, %v1253
        %v1255 = vpop.f32.mrb[0].mxu0
        %v1256 = vpop.f32.mrb[0].mxu0
        %v1257 = vadd.f32 0.0, %v1256
        %v1258 = vpop.f32.mrb[0].mxu0
        %1259 = vdwg.mxu0
        %1260 = vrot.lane.b32.xlu0 %v694, 48
        %v1261 = vpop.permute.xlu0 %1260
        %1262 = vrot.lane.b32.xlu0 %v697, 48
        %v1263 = vpop.permute.xlu0 %1262
        %v1266 = vsel %vm934, %v1261, %v1083
        %v1267 = vsel %vm934, %v1263, %v1085
        %1268 = vrot.lane.b32.xlu0 %v566, 64
        %v1269 = vpop.permute.xlu0 %1268
        %1270 = vrot.lane.b32.xlu0 %v567, 64
        %v1271 = vpop.permute.xlu0 %1270
        %v1274 = vmul.f32 %v694, %v1269
        %v1275 = vmul.f32 %v697, %v1271
        %v1276 = vmul.f32 %v1266, %v568
        %v1277 = vmul.f32 %v1267, %v569
        %1280 = vrot.lane.b32.xlu0 %v1276, 64
        %v1281 = vpop.permute.xlu0 %1280
        %1282 = vrot.lane.b32.xlu0 %v1277, 64
        %v1283 = vpop.permute.xlu0 %1282
        %v1286 = vadd.f32 %v1274, %v1281
        %v1287 = vadd.f32 %v1275, %v1283
        %v1288 = vpack.c.bf16 %v1287, %v1286
        %1289 = vrot.lane.b32.xlu0 %v799, 48
        %v1290 = vpop.permute.xlu0 %1289
        %1291 = vrot.lane.b32.xlu0 %v802, 48
        %v1292 = vpop.permute.xlu0 %1291
        %v1295 = vsel %vm934, %v1290, %v1114
        %v1296 = vsel %vm934, %v1292, %v1116
        %v1297 = vmul.f32 %v799, %v1269
        %v1298 = vmul.f32 %v802, %v1271
        %v1299 = vmul.f32 %v1295, %v568
        %v1300 = vmul.f32 %v1296, %v569
        %1303 = vrot.lane.b32.xlu0 %v1299, 64
        %v1304 = vpop.permute.xlu0 %1303
        %1305 = vrot.lane.b32.xlu0 %v1300, 64
        %v1306 = vpop.permute.xlu0 %1305
        %v1309 = vadd.f32 %v1297, %v1304
        %v1310 = vadd.f32 %v1298, %v1306
        %v1311 = vpack.c.bf16 %v1310, %v1309
        %1313 = vrot.lane.b32.xlu0 %v1288, 64
        %v1314 = vpop.permute.xlu0 %1313
        %1316 = vrot.lane.b32.xlu0 %v1311, 64
        %v1317 = vpop.permute.xlu0 %1316
        %v1319 = vsel %vm967, %v1314, 0
        %v1322 = vsel %vm967, %v1317, 0
        %1324 = vmatprep.subr.bf16.mxu0 0
        %1325 = vmatpush1.bf16.xpose.msra.mxu0 %v1322
        %1326 = vmatprep.subr.bf16.mxu0 0
        %1327 = vmatpush1.bf16.xpose.msra.mxu0 0
        %1328 = vmatprep.subr.bf16.mxu0 0
        %1329 = vmatpush1.bf16.xpose.msra.mxu0 0
        %1330 = vmatprep.subr.bf16.mxu0 0
        %1331 = vmatpush1.bf16.xpose.msra.mxu0 0
        %1332 = vmatprep.subr.bf16.mxu0 0
        %1333 = vmatpush1.bf16.xpose.msra.mxu0 0
        %1334 = vmatprep.subr.bf16.mxu0 0
        %1335 = vmatpush1.bf16.xpose.msra.mxu0 0
        %1336 = vmatprep.subr.bf16.mxu0 0
        %1337 = vmatpush1.bf16.xpose.msra.mxu0 0
        %1338 = vmatprep.subr.bf16.mxu0 0
        %1339 = vmatpush1.bf16.xpose.msra.mxu0 0
        %1340 = vmatprep.subr.bf16.mxu0 0
        %1341 = vmatpush1.bf16.xpose.msra.mxu0 0
        %1342 = vmatprep.subr.bf16.mxu0 0
        %1343 = vmatpush1.bf16.xpose.msra.mxu0 0
        %1344 = vmatprep.subr.bf16.mxu0 0
        %1345 = vmatpush1.bf16.xpose.msra.mxu0 0
        %1346 = vmatprep.subr.bf16.mxu0 0
        %1347 = vmatpush1.bf16.xpose.msra.mxu0 0
        %1348 = vmatprep.subr.bf16.mxu0 0
        %1349 = vmatpush1.bf16.xpose.msra.mxu0 0
        %1350 = vmatprep.subr.bf16.mxu0 0
        %1351 = vmatpush1.bf16.xpose.msra.mxu0 0
        %1352 = vmatprep.subr.bf16.mxu0 0
        %1353 = vmatpush1.bf16.xpose.msra.mxu0 0
        %1354 = vmatprep.subr.bf16.mxu0 0
        %1355 = vmatpush1.bf16.xpose.msra.mxu0 0
        %1356 = vmatprep.mubr.bf16.mxu0 0
        %1357 = vmatmul.mubr.bf16.gmra.mrb[0].mxu0 %v1319
        %v1358 = vpop.f32.mrb[0].mxu0
        %v1359 = vadd.f32 %v918, %v1358
        %v1360 = vpop.f32.mrb[0].mxu0
        %v1361 = vpop.f32.mrb[0].mxu0
        %v1362 = vadd.f32 %v919, %v1361
        %v1363 = vpop.f32.mrb[0].mxu0
        %1364 = vdwg.mxu0
        %v1365 = vsel %vm934, %v1359, -inf
        %1366 = vmax.xlane.f32.xlu0 %v1365
        %v1367 = vpop.xlane.xlu0 %1366
        %v1368 = vsel %vm934, %v1362, -inf
        %1369 = vmax.xlane.f32.xlu0 %v1368
        %v1370 = vpop.xlane.xlu0 %1369
        %v1371 = vsub.f32 %v1359, %v1367
        %v1372 = vsub.f32 %v1362, %v1370
        %v1373 = vmul.f32 %v1371, 1.442695
        %v1374 = vpow.pop %v1373
        %v1375 = vmul.f32 %v1372, 1.442695
        %v1376 = vpow.pop %v1375
        %v1377 = vsel %vm934, %v1374, 0.0
        %1378 = vadd.xlane.f32.xlu0 %v1377
        %v1379 = vpop.xlane.xlu0 %1378
        %v1380 = vsel %vm934, %v1376, 0.0
        %1381 = vadd.xlane.f32.xlu0 %v1380
        %v1382 = vpop.xlane.xlu0 %1381
        %v1383 = vrcp.pop %v1379
        %v1384 = vrcp.pop %v1382
        %v1385 = vmul.f32 %v1374, %v1383
        %v1386 = vmul.f32 %v1376, %v1384
        %v1387 = vpack.c.bf16 %v1386, %v1385
        %1388 = vrot.lane.b32.xlu0 %v910, 64
        %v1389 = vpop.permute.xlu0 %1388
        %v1392 = vsel %vm934, %v1387, 0
        %1394 = vmatprep.subr.bf16.mxu0 0
        %1395 = vmatpush1.bf16.msra.mxu0 %v1389
        %1396 = vmatprep.subr.bf16.mxu0 0
        %1397 = vmatpush1.bf16.msra.mxu0 0
        %1398 = vmatprep.subr.bf16.mxu0 0
        %1399 = vmatpush1.bf16.msra.mxu0 0
        %1400 = vmatprep.subr.bf16.mxu0 0
        %1401 = vmatpush1.bf16.msra.mxu0 0
        %1402 = vmatprep.subr.bf16.mxu0 0
        %1403 = vmatpush1.bf16.msra.mxu0 0
        %1404 = vmatprep.subr.bf16.mxu0 0
        %1405 = vmatpush1.bf16.msra.mxu0 0
        %1406 = vmatprep.subr.bf16.mxu0 0
        %1407 = vmatpush1.bf16.msra.mxu0 0
        %1408 = vmatprep.subr.bf16.mxu0 0
        %1409 = vmatpush1.bf16.msra.mxu0 0
        %1410 = vmatprep.subr.bf16.mxu0 0
        %1411 = vmatpush1.bf16.msra.mxu0 0
        %1412 = vmatprep.subr.bf16.mxu0 0
        %1413 = vmatpush1.bf16.msra.mxu0 0
        %1414 = vmatprep.subr.bf16.mxu0 0
        %1415 = vmatpush1.bf16.msra.mxu0 0
        %1416 = vmatprep.subr.bf16.mxu0 0
        %1417 = vmatpush1.bf16.msra.mxu0 0
        %1418 = vmatprep.subr.bf16.mxu0 0
        %1419 = vmatpush1.bf16.msra.mxu0 0
        %1420 = vmatprep.subr.bf16.mxu0 0
        %1421 = vmatpush1.bf16.msra.mxu0 0
        %1422 = vmatprep.subr.bf16.mxu0 0
        %1423 = vmatpush1.bf16.msra.mxu0 0
        %1424 = vmatprep.subr.bf16.mxu0 0
        %1425 = vmatpush1.bf16.msra.mxu0 0
        %1426 = vmatprep.mubr.bf16.mxu0 0
        %1427 = vmatmul.mubr.bf16.gmra.mrb[0].mxu0 %v1392
        %v1428 = vpop.f32.mrb[0].mxu0
        %v1429 = vadd.f32 0.0, %v1428
        %v1430 = vpop.f32.mrb[0].mxu0
        %v1431 = vpop.f32.mrb[0].mxu0
        %v1432 = vadd.f32 0.0, %v1431
        %v1433 = vpop.f32.mrb[0].mxu0
        %1434 = vdwg.mxu0
        %v1435 = vsel %vm934, %v929, %v1261
        %v1436 = vsel %vm934, %v931, %v1263
        %1437 = vrot.lane.b32.xlu0 %v566, 96
        %v1438 = vpop.permute.xlu0 %1437
        %1439 = vrot.lane.b32.xlu0 %v567, 96
        %v1440 = vpop.permute.xlu0 %1439
        %v1443 = vmul.f32 %v694, %v1438
        %v1444 = vmul.f32 %v697, %v1440
        %v1445 = vmul.f32 %v1435, %v568
        %v1446 = vmul.f32 %v1436, %v569
        %1449 = vrot.lane.b32.xlu0 %v1445, 96
        %v1450 = vpop.permute.xlu0 %1449
        %1451 = vrot.lane.b32.xlu0 %v1446, 96
        %v1452 = vpop.permute.xlu0 %1451
        %v1455 = vadd.f32 %v1443, %v1450
        %v1456 = vadd.f32 %v1444, %v1452
        %v1457 = vpack.c.bf16 %v1456, %v1455
        %v1458 = vsel %vm934, %v953, %v1290
        %v1459 = vsel %vm934, %v955, %v1292
        %v1460 = vmul.f32 %v799, %v1438
        %v1461 = vmul.f32 %v802, %v1440
        %v1462 = vmul.f32 %v1458, %v568
        %v1463 = vmul.f32 %v1459, %v569
        %1466 = vrot.lane.b32.xlu0 %v1462, 96
        %v1467 = vpop.permute.xlu0 %1466
        %1468 = vrot.lane.b32.xlu0 %v1463, 96
        %v1469 = vpop.permute.xlu0 %1468
        %v1472 = vadd.f32 %v1460, %v1467
        %v1473 = vadd.f32 %v1461, %v1469
        %v1474 = vpack.c.bf16 %v1473, %v1472
        %1476 = vrot.lane.b32.xlu0 %v1457, 32
        %v1477 = vpop.permute.xlu0 %1476
        %1479 = vrot.lane.b32.xlu0 %v1474, 32
        %v1480 = vpop.permute.xlu0 %1479
        %v1482 = vsel %vm967, %v1477, 0
        %v1485 = vsel %vm967, %v1480, 0
        %1487 = vmatprep.subr.bf16.mxu0 0
        %1488 = vmatpush1.bf16.xpose.msra.mxu0 %v1485
        %1489 = vmatprep.subr.bf16.mxu0 0
        %1490 = vmatpush1.bf16.xpose.msra.mxu0 0
        %1491 = vmatprep.subr.bf16.mxu0 0
        %1492 = vmatpush1.bf16.xpose.msra.mxu0 0
        %1493 = vmatprep.subr.bf16.mxu0 0
        %1494 = vmatpush1.bf16.xpose.msra.mxu0 0
        %1495 = vmatprep.subr.bf16.mxu0 0
        %1496 = vmatpush1.bf16.xpose.msra.mxu0 0
        %1497 = vmatprep.subr.bf16.mxu0 0
        %1498 = vmatpush1.bf16.xpose.msra.mxu0 0
        %1499 = vmatprep.subr.bf16.mxu0 0
        %1500 = vmatpush1.bf16.xpose.msra.mxu0 0
        %1501 = vmatprep.subr.bf16.mxu0 0
        %1502 = vmatpush1.bf16.xpose.msra.mxu0 0
        %1503 = vmatprep.subr.bf16.mxu0 0
        %1504 = vmatpush1.bf16.xpose.msra.mxu0 0
        %1505 = vmatprep.subr.bf16.mxu0 0
        %1506 = vmatpush1.bf16.xpose.msra.mxu0 0
        %1507 = vmatprep.subr.bf16.mxu0 0
        %1508 = vmatpush1.bf16.xpose.msra.mxu0 0
        %1509 = vmatprep.subr.bf16.mxu0 0
        %1510 = vmatpush1.bf16.xpose.msra.mxu0 0
        %1511 = vmatprep.subr.bf16.mxu0 0
        %1512 = vmatpush1.bf16.xpose.msra.mxu0 0
        %1513 = vmatprep.subr.bf16.mxu0 0
        %1514 = vmatpush1.bf16.xpose.msra.mxu0 0
        %1515 = vmatprep.subr.bf16.mxu0 0
        %1516 = vmatpush1.bf16.xpose.msra.mxu0 0
        %1517 = vmatprep.subr.bf16.mxu0 0
        %1518 = vmatpush1.bf16.xpose.msra.mxu0 0
        %1519 = vmatprep.mubr.bf16.mxu0 0
        %1520 = vmatmul.mubr.bf16.gmra.mrb[0].mxu0 %v1482
        %v1521 = vpop.f32.mrb[0].mxu0
        %v1522 = vadd.f32 %v918, %v1521
        %v1523 = vpop.f32.mrb[0].mxu0
        %v1524 = vpop.f32.mrb[0].mxu0
        %v1525 = vadd.f32 %v919, %v1524
        %v1526 = vpop.f32.mrb[0].mxu0
        %1527 = vdwg.mxu0
        %v1528 = vsel %vm934, %v1522, -inf
        %1529 = vmax.xlane.f32.xlu0 %v1528
        %v1530 = vpop.xlane.xlu0 %1529
        %v1531 = vsel %vm934, %v1525, -inf
        %1532 = vmax.xlane.f32.xlu0 %v1531
        %v1533 = vpop.xlane.xlu0 %1532
        %v1534 = vsub.f32 %v1522, %v1530
        %v1535 = vsub.f32 %v1525, %v1533
        %v1536 = vmul.f32 %v1534, 1.442695
        %v1537 = vpow.pop %v1536
        %v1538 = vmul.f32 %v1535, 1.442695
        %v1539 = vpow.pop %v1538
        %v1540 = vsel %vm934, %v1537, 0.0
        %1541 = vadd.xlane.f32.xlu0 %v1540
        %v1542 = vpop.xlane.xlu0 %1541
        %v1543 = vsel %vm934, %v1539, 0.0
        %1544 = vadd.xlane.f32.xlu0 %v1543
        %v1545 = vpop.xlane.xlu0 %1544
        %v1546 = vrcp.pop %v1542
        %v1547 = vrcp.pop %v1545
        %v1548 = vmul.f32 %v1537, %v1546
        %v1549 = vmul.f32 %v1539, %v1547
        %v1550 = vpack.c.bf16 %v1549, %v1548
        %1551 = vrot.lane.b32.xlu0 %v910, 32
        %v1552 = vpop.permute.xlu0 %1551
        %v1555 = vsel %vm934, %v1550, 0
        %1557 = vmatprep.subr.bf16.mxu0 0
        %1558 = vmatpush1.bf16.msra.mxu0 %v1552
        %1559 = vmatprep.subr.bf16.mxu0 0
        %1560 = vmatpush1.bf16.msra.mxu0 0
        %1561 = vmatprep.subr.bf16.mxu0 0
        %1562 = vmatpush1.bf16.msra.mxu0 0
        %1563 = vmatprep.subr.bf16.mxu0 0
        %1564 = vmatpush1.bf16.msra.mxu0 0
        %1565 = vmatprep.subr.bf16.mxu0 0
        %1566 = vmatpush1.bf16.msra.mxu0 0
        %1567 = vmatprep.subr.bf16.mxu0 0
        %1568 = vmatpush1.bf16.msra.mxu0 0
        %1569 = vmatprep.subr.bf16.mxu0 0
        %1570 = vmatpush1.bf16.msra.mxu0 0
        %1571 = vmatprep.subr.bf16.mxu0 0
        %1572 = vmatpush1.bf16.msra.mxu0 0
        %1573 = vmatprep.subr.bf16.mxu0 0
        %1574 = vmatpush1.bf16.msra.mxu0 0
        %1575 = vmatprep.subr.bf16.mxu0 0
        %1576 = vmatpush1.bf16.msra.mxu0 0
        %1577 = vmatprep.subr.bf16.mxu0 0
        %1578 = vmatpush1.bf16.msra.mxu0 0
        %1579 = vmatprep.subr.bf16.mxu0 0
        %1580 = vmatpush1.bf16.msra.mxu0 0
        %1581 = vmatprep.subr.bf16.mxu0 0
        %1582 = vmatpush1.bf16.msra.mxu0 0
        %1583 = vmatprep.subr.bf16.mxu0 0
        %1584 = vmatpush1.bf16.msra.mxu0 0
        %1585 = vmatprep.subr.bf16.mxu0 0
        %1586 = vmatpush1.bf16.msra.mxu0 0
        %1587 = vmatprep.subr.bf16.mxu0 0
        %1588 = vmatpush1.bf16.msra.mxu0 0
        %1589 = vmatprep.mubr.bf16.mxu0 0
        %1590 = vmatmul.mubr.bf16.gmra.mrb[0].mxu0 %v1555
        %v1591 = vpop.f32.mrb[0].mxu0
        %v1592 = vadd.f32 0.0, %v1591
        %v1593 = vpop.f32.mrb[0].mxu0
        %v1594 = vpop.f32.mrb[0].mxu0
        %v1595 = vadd.f32 0.0, %v1594
        %v1596 = vpop.f32.mrb[0].mxu0
        %1597 = vdwg.mxu0
        %1600 = vrot.lane.b32.xlu0 %v1254, 32
        %v1601 = vpop.permute.xlu0 %1600
        %1602 = vrot.lane.b32.xlu0 %v1257, 32
        %v1603 = vpop.permute.xlu0 %1602
        %1608 = vrot.lane.b32.xlu0 %v1429, 64
        %v1609 = vpop.permute.xlu0 %1608
        %1610 = vrot.lane.b32.xlu0 %v1432, 64
        %v1611 = vpop.permute.xlu0 %1610
        %1616 = vrot.lane.b32.xlu0 %v1592, 96
        %v1617 = vpop.permute.xlu0 %1616
        %1618 = vrot.lane.b32.xlu0 %v1595, 96
        %v1619 = vpop.permute.xlu0 %1618
        %v1622 = vsel %vm967, %v1076, %v1601
        %v1623 = vsel %vm967, %v1079, %v1603
        %vm1624 = vcmask 523264
        %v1625 = vsel %vm1624, %v1622, %v1609
        %v1626 = vsel %vm1624, %v1623, %v1611
        %vm1627 = vcmask 785408
        %v1628 = vsel %vm1627, %v1625, %v1617
        %v1629 = vsel %vm1627, %v1626, %v1619
        %v1630 = vpack.c.bf16 %v1629, %v1628
        %v1631 = vld [vmem:[#allocation13] sm:$0xf]
        %v1632 = vld [vmem:[#allocation13 + $0x4] sm:$0xf]
        %v1633 = vld [vmem:[#allocation13 + $0x8] sm:$0xf]
        %v1634 = vld [vmem:[#allocation13 + $0xc] sm:$0xf]
        %v1635 = vld [vmem:[#allocation13 + $0x10] sm:$0xf]
        %v1636 = vld [vmem:[#allocation13 + $0x14] sm:$0xf]
        %v1637 = vld [vmem:[#allocation13 + $0x18] sm:$0xf]
        %v1638 = vld [vmem:[#allocation13 + $0x1c] sm:$0xf]
        %v1639 = vld [vmem:[#allocation13 + $0x20] sm:$0xf]
        %v1640 = vld [vmem:[#allocation13 + $0x24] sm:$0xf]
        %v1641 = vld [vmem:[#allocation13 + $0x28] sm:$0xf]
        %v1642 = vld [vmem:[#allocation13 + $0x2c] sm:$0xf]
        %v1643 = vld [vmem:[#allocation13 + $0x30] sm:$0xf]
        %v1644 = vld [vmem:[#allocation13 + $0x34] sm:$0xf]
        %v1645 = vld [vmem:[#allocation13 + $0x38] sm:$0xf]
        %v1646 = vld [vmem:[#allocation13 + $0x3c] sm:$0xf]
        %v1663 = vunpack.c.l.b16 %v1631
        %v1664 = vunpack.c.l.b16 %v1632
        %v1665 = vunpack.c.l.b16 %v1633
        %v1666 = vunpack.c.l.b16 %v1634
        %v1667 = vunpack.c.l.b16 %v1635
        %v1668 = vunpack.c.l.b16 %v1636
        %v1669 = vunpack.c.l.b16 %v1637
        %v1670 = vunpack.c.l.b16 %v1638
        %v1671 = vunpack.c.l.b16 %v1639
        %v1672 = vunpack.c.l.b16 %v1640
        %v1673 = vunpack.c.l.b16 %v1641
        %v1674 = vunpack.c.l.b16 %v1642
        %v1675 = vunpack.c.l.b16 %v1643
        %v1676 = vunpack.c.l.b16 %v1644
        %v1677 = vunpack.c.l.b16 %v1645
        %v1678 = vunpack.c.l.b16 %v1646
        %v1679 = vpack.c.b16 %v1664, %v1663
        %v1680 = vpack.c.b16 %v1666, %v1665
        %v1681 = vpack.c.b16 %v1668, %v1667
        %v1682 = vpack.c.b16 %v1670, %v1669
        %v1683 = vpack.c.b16 %v1672, %v1671
        %v1684 = vpack.c.b16 %v1674, %v1673
        %v1685 = vpack.c.b16 %v1676, %v1675
        %v1686 = vpack.c.b16 %v1678, %v1677
        %1695 = vmatprep.subr.bf16.mxu0 0
        %1696 = vmatpush1.bf16.msra.mxu0 %v1679
        %1697 = vmatprep.subr.bf16.mxu0 0
        %1698 = vmatpush1.bf16.msra.mxu0 %v1680
        %1699 = vmatprep.subr.bf16.mxu0 0
        %1700 = vmatpush1.bf16.msra.mxu0 %v1681
        %1701 = vmatprep.subr.bf16.mxu0 0
        %1702 = vmatpush1.bf16.msra.mxu0 %v1682
        %1703 = vmatprep.subr.bf16.mxu0 0
        %1704 = vmatpush1.bf16.msra.mxu0 %v1683
        %1705 = vmatprep.subr.bf16.mxu0 0
        %1706 = vmatpush1.bf16.msra.mxu0 %v1684
        %1707 = vmatprep.subr.bf16.mxu0 0
        %1708 = vmatpush1.bf16.msra.mxu0 %v1685
        %1709 = vmatprep.subr.bf16.mxu0 0
        %1710 = vmatpush1.bf16.msra.mxu0 %v1686
        %1711 = vmatprep.subr.bf16.mxu0 0
        %1712 = vmatpush1.bf16.msra.mxu0 0
        %1713 = vmatprep.subr.bf16.mxu0 0
        %1714 = vmatpush1.bf16.msra.mxu0 0
        %1715 = vmatprep.subr.bf16.mxu0 0
        %1716 = vmatpush1.bf16.msra.mxu0 0
        %1717 = vmatprep.subr.bf16.mxu0 0
        %1718 = vmatpush1.bf16.msra.mxu0 0
        %1719 = vmatprep.subr.bf16.mxu0 0
        %1720 = vmatpush1.bf16.msra.mxu0 0
        %1721 = vmatprep.subr.bf16.mxu0 0
        %1722 = vmatpush1.bf16.msra.mxu0 0
        %1723 = vmatprep.subr.bf16.mxu0 0
        %1724 = vmatpush1.bf16.msra.mxu0 0
        %1725 = vmatprep.subr.bf16.mxu0 0
        %1726 = vmatpush1.bf16.msra.mxu0 0
        %1727 = vmatprep.mubr.bf16.mxu0 0
        %1728 = vmatmul.mubr.bf16.gmra.mrb[0].mxu0 %v1630
        %v1729 = vpop.f32.mrb[0].mxu0
        %v1730 = vadd.f32 0.0, %v1729
        %v1731 = vpop.f32.mrb[0].mxu0
        %v1732 = vpop.f32.mrb[0].mxu0
        %v1733 = vadd.f32 0.0, %v1732
        %v1734 = vpop.f32.mrb[0].mxu0
        %1735 = vdwg.mxu0
        %v1736 = vadd.f32 %v564, %v1730
        %v1737 = vadd.f32 %v565, %v1733
        %v1738 = vld [vmem:[%s11] sm:$0x1]
        %v1739 = vmul.f32 %v1736, %v1736
        %v1740 = vmul.f32 %v1737, %v1737
        %1741 = vadd.xlane.f32.xlu0 %v1739
        %v1742 = vpop.xlane.xlu0 %1741
        %1743 = vadd.xlane.f32.xlu0 %v1740
        %v1744 = vpop.xlane.xlu0 %1743
        %v1745 = vmul.f32 %v1742, %v577
        %v1746 = vmul.f32 %v1744, %v577
        %v1747 = vadd.f32 %v1745, 1e-05
        %v1748 = vadd.f32 %v1746, 1e-05
        %v1749 = vrsqrt.pop %v1747
        %v1750 = vrsqrt.pop %v1748
        %v1751 = vmul.f32 %v1736, %v1749
        %v1752 = vmul.f32 %v1737, %v1750
        %v1754 = vlaneseq
        %v1755 = vshrl.u32 %v1754, 7
        %v1756 = vsub.s32 0, %v1755
        %v1757 = vrot.slane %v1738, %v1756
        %v1759 = vmul.f32 %v1751, %v1757
        %v1760 = vmul.f32 %v1752, %v1757
        %v1761 = vpack.c.bf16 %v1760, %v1759
        %v1762 = vld [vmem:[#allocation14] sm:$0xff]
        %v1763 = vld [vmem:[#allocation14 + $0x8] sm:$0xf]
        %v1764 = vld [vmem:[#allocation14 + $0xc] sm:$0xff]
        %v1765 = vld [vmem:[#allocation14 + $0x14] sm:$0xf]
        %v1766 = vld [vmem:[#allocation14 + $0x18] sm:$0xff]
        %v1767 = vld [vmem:[#allocation14 + $0x20] sm:$0xf]
        %v1768 = vld [vmem:[#allocation14 + $0x24] sm:$0xff]
        %v1769 = vld [vmem:[#allocation14 + $0x2c] sm:$0xf]
        %v1770 = vld [vmem:[#allocation14 + $0x30] sm:$0xff]
        %v1771 = vld [vmem:[#allocation14 + $0x38] sm:$0xf]
        %v1772 = vld [vmem:[#allocation14 + $0x3c] sm:$0xff]
        %v1773 = vld [vmem:[#allocation14 + $0x44] sm:$0xf]
        %v1774 = vld [vmem:[#allocation14 + $0x48] sm:$0xff]
        %v1775 = vld [vmem:[#allocation14 + $0x50] sm:$0xf]
        %v1776 = vld [vmem:[#allocation14 + $0x54] sm:$0xff]
        %v1777 = vld [vmem:[#allocation14 + $0x5c] sm:$0xf]
        %v1778 = vld [vmem:[#allocation14 + $0x60] sm:$0xff]
        %v1779 = vld [vmem:[#allocation14 + $0x68] sm:$0xf]
        %v1780 = vld [vmem:[#allocation14 + $0x6c] sm:$0xff]
        %v1781 = vld [vmem:[#allocation14 + $0x74] sm:$0xf]
        %v1782 = vld [vmem:[#allocation14 + $0x78] sm:$0xff]
        %v1783 = vld [vmem:[#allocation14 + $0x80] sm:$0xf]
        %v1784 = vld [vmem:[#allocation14 + $0x84] sm:$0xff]
        %v1785 = vld [vmem:[#allocation14 + $0x8c] sm:$0xf]
        %v1786 = vld [vmem:[#allocation14 + $0x90] sm:$0xff]
        %v1787 = vld [vmem:[#allocation14 + $0x98] sm:$0xf]
        %v1788 = vld [vmem:[#allocation14 + $0x9c] sm:$0xff]
        %v1789 = vld [vmem:[#allocation14 + $0xa4] sm:$0xf]
        %v1790 = vld [vmem:[#allocation14 + $0xa8] sm:$0xff]
        %v1791 = vld [vmem:[#allocation14 + $0xb0] sm:$0xf]
        %v1792 = vld [vmem:[#allocation14 + $0xb4] sm:$0xff]
        %v1793 = vld [vmem:[#allocation14 + $0xbc] sm:$0xf]
        %v1826 = vunpack.c.l.b16 %v1762
        %v1827 = vunpack.c.h.b16 %v1762
        %v1828 = vunpack.c.l.b16 %v1763
        %v1829 = vunpack.c.l.b16 %v1764
        %v1830 = vunpack.c.h.b16 %v1764
        %v1831 = vunpack.c.l.b16 %v1765
        %v1832 = vunpack.c.l.b16 %v1766
        %v1833 = vunpack.c.h.b16 %v1766
        %v1834 = vunpack.c.l.b16 %v1767
        %v1835 = vunpack.c.l.b16 %v1768
        %v1836 = vunpack.c.h.b16 %v1768
        %v1837 = vunpack.c.l.b16 %v1769
        %v1838 = vunpack.c.l.b16 %v1770
        %v1839 = vunpack.c.h.b16 %v1770
        %v1840 = vunpack.c.l.b16 %v1771
        %v1841 = vunpack.c.l.b16 %v1772
        %v1842 = vunpack.c.h.b16 %v1772
        %v1843 = vunpack.c.l.b16 %v1773
        %v1844 = vunpack.c.l.b16 %v1774
        %v1845 = vunpack.c.h.b16 %v1774
        %v1846 = vunpack.c.l.b16 %v1775
        %v1847 = vunpack.c.l.b16 %v1776
        %v1848 = vunpack.c.h.b16 %v1776
        %v1849 = vunpack.c.l.b16 %v1777
        %v1850 = vunpack.c.l.b16 %v1778
        %v1851 = vunpack.c.h.b16 %v1778
        %v1852 = vunpack.c.l.b16 %v1779
        %v1853 = vunpack.c.l.b16 %v1780
        %v1854 = vunpack.c.h.b16 %v1780
        %v1855 = vunpack.c.l.b16 %v1781
        %v1856 = vunpack.c.l.b16 %v1782
        %v1857 = vunpack.c.h.b16 %v1782
        %v1858 = vunpack.c.l.b16 %v1783
        %v1859 = vunpack.c.l.b16 %v1784
        %v1860 = vunpack.c.h.b16 %v1784
        %v1861 = vunpack.c.l.b16 %v1785
        %v1862 = vunpack.c.l.b16 %v1786
        %v1863 = vunpack.c.h.b16 %v1786
        %v1864 = vunpack.c.l.b16 %v1787
        %v1865 = vunpack.c.l.b16 %v1788
        %v1866 = vunpack.c.h.b16 %v1788
        %v1867 = vunpack.c.l.b16 %v1789
        %v1868 = vunpack.c.l.b16 %v1790
        %v1869 = vunpack.c.h.b16 %v1790
        %v1870 = vunpack.c.l.b16 %v1791
        %v1871 = vunpack.c.l.b16 %v1792
        %v1872 = vunpack.c.h.b16 %v1792
        %v1873 = vunpack.c.l.b16 %v1793
        %v1874 = vpack.c.b16 %v1829, %v1826
        %v1875 = vpack.c.b16 %v1830, %v1827
        %v1876 = vpack.c.b16 %v1831, %v1828
        %v1877 = vpack.c.b16 %v1835, %v1832
        %v1878 = vpack.c.b16 %v1836, %v1833
        %v1879 = vpack.c.b16 %v1837, %v1834
        %v1880 = vpack.c.b16 %v1841, %v1838
        %v1881 = vpack.c.b16 %v1842, %v1839
        %v1882 = vpack.c.b16 %v1843, %v1840
        %v1883 = vpack.c.b16 %v1847, %v1844
        %v1884 = vpack.c.b16 %v1848, %v1845
        %v1885 = vpack.c.b16 %v1849, %v1846
        %v1886 = vpack.c.b16 %v1853, %v1850
        %v1887 = vpack.c.b16 %v1854, %v1851
        %v1888 = vpack.c.b16 %v1855, %v1852
        %v1889 = vpack.c.b16 %v1859, %v1856
        %v1890 = vpack.c.b16 %v1860, %v1857
        %v1891 = vpack.c.b16 %v1861, %v1858
        %v1892 = vpack.c.b16 %v1865, %v1862
        %v1893 = vpack.c.b16 %v1866, %v1863
        %v1894 = vpack.c.b16 %v1867, %v1864
        %v1895 = vpack.c.b16 %v1871, %v1868
        %v1896 = vpack.c.b16 %v1872, %v1869
        %v1897 = vpack.c.b16 %v1873, %v1870
        %1922 = vmatprep.subr.bf16.mxu0 %v1875
        %1923 = vmatpush1.bf16.msra.mxu0 %v1874
        %1924 = vmatprep.subr.bf16.mxu0 %v1878
        %1925 = vmatpush1.bf16.msra.mxu0 %v1877
        %1926 = vmatprep.subr.bf16.mxu0 %v1881
        %1927 = vmatpush1.bf16.msra.mxu0 %v1880
        %1928 = vmatprep.subr.bf16.mxu0 %v1884
        %1929 = vmatpush1.bf16.msra.mxu0 %v1883
        %1930 = vmatprep.subr.bf16.mxu0 %v1887
        %1931 = vmatpush1.bf16.msra.mxu0 %v1886
        %1932 = vmatprep.subr.bf16.mxu0 %v1890
        %1933 = vmatpush1.bf16.msra.mxu0 %v1889
        %1934 = vmatprep.subr.bf16.mxu0 %v1893
        %1935 = vmatpush1.bf16.msra.mxu0 %v1892
        %1936 = vmatprep.subr.bf16.mxu0 %v1896
        %1937 = vmatpush1.bf16.msra.mxu0 %v1895
        %1938 = vmatprep.subr.bf16.mxu0 0
        %1939 = vmatpush1.bf16.msra.mxu0 0
        %1940 = vmatprep.subr.bf16.mxu0 0
        %1941 = vmatpush1.bf16.msra.mxu0 0
        %1942 = vmatprep.subr.bf16.mxu0 0
        %1943 = vmatpush1.bf16.msra.mxu0 0
        %1944 = vmatprep.subr.bf16.mxu0 0
        %1945 = vmatpush1.bf16.msra.mxu0 0
        %1946 = vmatprep.subr.bf16.mxu0 0
        %1947 = vmatpush1.bf16.msra.mxu0 0
        %1948 = vmatprep.subr.bf16.mxu0 0
        %1949 = vmatpush1.bf16.msra.mxu0 0
        %1950 = vmatprep.subr.bf16.mxu0 0
        %1951 = vmatpush1.bf16.msra.mxu0 0
        %1952 = vmatprep.subr.bf16.mxu0 0
        %1953 = vmatpush1.bf16.msra.mxu0 0
        %1954 = vmatprep.mubr.bf16.mxu0 0
        %1955 = vmatmul.mubr.bf16.gmra.mrb[0].mxu0 %v1761
        %v1956 = vpop.f32.mrb[0].mxu0
        %v1957 = vadd.f32 0.0, %v1956
        %v1958 = vpop.f32.mrb[0].mxu0
        %v1959 = vadd.f32 0.0, %v1958
        %v1960 = vpop.f32.mrb[0].mxu0
        %v1961 = vadd.f32 0.0, %v1960
        %v1962 = vpop.f32.mrb[0].mxu0
        %v1963 = vadd.f32 0.0, %v1962
        %1964 = vdwg.mxu0
        %1965 = vmatprep.subr.bf16.mxu0 0
        %1966 = vmatpush1.bf16.msra.mxu0 %v1876
        %1967 = vmatprep.subr.bf16.mxu0 0
        %1968 = vmatpush1.bf16.msra.mxu0 %v1879
        %1969 = vmatprep.subr.bf16.mxu0 0
        %1970 = vmatpush1.bf16.msra.mxu0 %v1882
        %1971 = vmatprep.subr.bf16.mxu0 0
        %1972 = vmatpush1.bf16.msra.mxu0 %v1885
        %1973 = vmatprep.subr.bf16.mxu0 0
        %1974 = vmatpush1.bf16.msra.mxu0 %v1888
        %1975 = vmatprep.subr.bf16.mxu0 0
        %1976 = vmatpush1.bf16.msra.mxu0 %v1891
        %1977 = vmatprep.subr.bf16.mxu0 0
        %1978 = vmatpush1.bf16.msra.mxu0 %v1894
        %1979 = vmatprep.subr.bf16.mxu0 0
        %1980 = vmatpush1.bf16.msra.mxu0 %v1897
        %1981 = vmatprep.subr.bf16.mxu0 0
        %1982 = vmatpush1.bf16.msra.mxu0 0
        %1983 = vmatprep.subr.bf16.mxu0 0
        %1984 = vmatpush1.bf16.msra.mxu0 0
        %1985 = vmatprep.subr.bf16.mxu0 0
        %1986 = vmatpush1.bf16.msra.mxu0 0
        %1987 = vmatprep.subr.bf16.mxu0 0
        %1988 = vmatpush1.bf16.msra.mxu0 0
        %1989 = vmatprep.subr.bf16.mxu0 0
        %1990 = vmatpush1.bf16.msra.mxu0 0
        %1991 = vmatprep.subr.bf16.mxu0 0
        %1992 = vmatpush1.bf16.msra.mxu0 0
        %1993 = vmatprep.subr.bf16.mxu0 0
        %1994 = vmatpush1.bf16.msra.mxu0 0
        %1995 = vmatprep.subr.bf16.mxu0 0
        %1996 = vmatpush1.bf16.msra.mxu0 0
        %1997 = vmatprep.mubr.bf16.mxu0 0
        %1998 = vmatmul.mubr.bf16.gmra.mrb[0].mxu0 %v1761
        %v1999 = vpop.f32.mrb[0].mxu0
        %v2000 = vadd.f32 0.0, %v1999
        %v2001 = vpop.f32.mrb[0].mxu0
        %v2002 = vpop.f32.mrb[0].mxu0
        %v2003 = vadd.f32 0.0, %v2002
        %v2004 = vpop.f32.mrb[0].mxu0
        %2005 = vdwg.mxu0
        %v2006 = vld [vmem:[#allocation17] sm:$0xff]
        %v2007 = vld [vmem:[#allocation17 + $0x8] sm:$0xf]
        %v2008 = vld [vmem:[#allocation17 + $0xc] sm:$0xff]
        %v2009 = vld [vmem:[#allocation17 + $0x14] sm:$0xf]
        %v2010 = vld [vmem:[#allocation17 + $0x18] sm:$0xff]
        %v2011 = vld [vmem:[#allocation17 + $0x20] sm:$0xf]
        %v2012 = vld [vmem:[#allocation17 + $0x24] sm:$0xff]
        %v2013 = vld [vmem:[#allocation17 + $0x2c] sm:$0xf]
        %v2014 = vld [vmem:[#allocation17 + $0x30] sm:$0xff]
        %v2015 = vld [vmem:[#allocation17 + $0x38] sm:$0xf]
        %v2016 = vld [vmem:[#allocation17 + $0x3c] sm:$0xff]
        %v2017 = vld [vmem:[#allocation17 + $0x44] sm:$0xf]
        %v2018 = vld [vmem:[#allocation17 + $0x48] sm:$0xff]
        %v2019 = vld [vmem:[#allocation17 + $0x50] sm:$0xf]
        %v2020 = vld [vmem:[#allocation17 + $0x54] sm:$0xff]
        %v2021 = vld [vmem:[#allocation17 + $0x5c] sm:$0xf]
        %v2022 = vld [vmem:[#allocation17 + $0x60] sm:$0xff]
        %v2023 = vld [vmem:[#allocation17 + $0x68] sm:$0xf]
        %v2024 = vld [vmem:[#allocation17 + $0x6c] sm:$0xff]
        %v2025 = vld [vmem:[#allocation17 + $0x74] sm:$0xf]
        %v2026 = vld [vmem:[#allocation17 + $0x78] sm:$0xff]
        %v2027 = vld [vmem:[#allocation17 + $0x80] sm:$0xf]
        %v2028 = vld [vmem:[#allocation17 + $0x84] sm:$0xff]
        %v2029 = vld [vmem:[#allocation17 + $0x8c] sm:$0xf]
        %v2030 = vld [vmem:[#allocation17 + $0x90] sm:$0xff]
        %v2031 = vld [vmem:[#allocation17 + $0x98] sm:$0xf]
        %v2032 = vld [vmem:[#allocation17 + $0x9c] sm:$0xff]
        %v2033 = vld [vmem:[#allocation17 + $0xa4] sm:$0xf]
        %v2034 = vld [vmem:[#allocation17 + $0xa8] sm:$0xff]
        %v2035 = vld [vmem:[#allocation17 + $0xb0] sm:$0xf]
        %v2036 = vld [vmem:[#allocation17 + $0xb4] sm:$0xff]
        %v2037 = vld [vmem:[#allocation17 + $0xbc] sm:$0xf]
        %v2070 = vunpack.c.l.b16 %v2006
        %v2071 = vunpack.c.h.b16 %v2006
        %v2072 = vunpack.c.l.b16 %v2007
        %v2073 = vunpack.c.l.b16 %v2008
        %v2074 = vunpack.c.h.b16 %v2008
        %v2075 = vunpack.c.l.b16 %v2009
        %v2076 = vunpack.c.l.b16 %v2010
        %v2077 = vunpack.c.h.b16 %v2010
        %v2078 = vunpack.c.l.b16 %v2011
        %v2079 = vunpack.c.l.b16 %v2012
        %v2080 = vunpack.c.h.b16 %v2012
        %v2081 = vunpack.c.l.b16 %v2013
        %v2082 = vunpack.c.l.b16 %v2014
        %v2083 = vunpack.c.h.b16 %v2014
        %v2084 = vunpack.c.l.b16 %v2015
        %v2085 = vunpack.c.l.b16 %v2016
        %v2086 = vunpack.c.h.b16 %v2016
        %v2087 = vunpack.c.l.b16 %v2017
        %v2088 = vunpack.c.l.b16 %v2018
        %v2089 = vunpack.c.h.b16 %v2018
        %v2090 = vunpack.c.l.b16 %v2019
        %v2091 = vunpack.c.l.b16 %v2020
        %v2092 = vunpack.c.h.b16 %v2020
        %v2093 = vunpack.c.l.b16 %v2021
        %v2094 = vunpack.c.l.b16 %v2022
        %v2095 = vunpack.c.h.b16 %v2022
        %v2096 = vunpack.c.l.b16 %v2023
        %v2097 = vunpack.c.l.b16 %v2024
        %v2098 = vunpack.c.h.b16 %v2024
        %v2099 = vunpack.c.l.b16 %v2025
        %v2100 = vunpack.c.l.b16 %v2026
        %v2101 = vunpack.c.h.b16 %v2026
        %v2102 = vunpack.c.l.b16 %v2027
        %v2103 = vunpack.c.l.b16 %v2028
        %v2104 = vunpack.c.h.b16 %v2028
        %v2105 = vunpack.c.l.b16 %v2029
        %v2106 = vunpack.c.l.b16 %v2030
        %v2107 = vunpack.c.h.b16 %v2030
        %v2108 = vunpack.c.l.b16 %v2031
        %v2109 = vunpack.c.l.b16 %v2032
        %v2110 = vunpack.c.h.b16 %v2032
        %v2111 = vunpack.c.l.b16 %v2033
        %v2112 = vunpack.c.l.b16 %v2034
        %v2113 = vunpack.c.h.b16 %v2034
        %v2114 = vunpack.c.l.b16 %v2035
        %v2115 = vunpack.c.l.b16 %v2036
        %v2116 = vunpack.c.h.b16 %v2036
        %v2117 = vunpack.c.l.b16 %v2037
        %v2118 = vpack.c.b16 %v2073, %v2070
        %v2119 = vpack.c.b16 %v2074, %v2071
        %v2120 = vpack.c.b16 %v2075, %v2072
        %v2121 = vpack.c.b16 %v2079, %v2076
        %v2122 = vpack.c.b16 %v2080, %v2077
        %v2123 = vpack.c.b16 %v2081, %v2078
        %v2124 = vpack.c.b16 %v2085, %v2082
        %v2125 = vpack.c.b16 %v2086, %v2083
        %v2126 = vpack.c.b16 %v2087, %v2084
        %v2127 = vpack.c.b16 %v2091, %v2088
        %v2128 = vpack.c.b16 %v2092, %v2089
        %v2129 = vpack.c.b16 %v2093, %v2090
        %v2130 = vpack.c.b16 %v2097, %v2094
        %v2131 = vpack.c.b16 %v2098, %v2095
        %v2132 = vpack.c.b16 %v2099, %v2096
        %v2133 = vpack.c.b16 %v2103, %v2100
        %v2134 = vpack.c.b16 %v2104, %v2101
        %v2135 = vpack.c.b16 %v2105, %v2102
        %v2136 = vpack.c.b16 %v2109, %v2106
        %v2137 = vpack.c.b16 %v2110, %v2107
        %v2138 = vpack.c.b16 %v2111, %v2108
        %v2139 = vpack.c.b16 %v2115, %v2112
        %v2140 = vpack.c.b16 %v2116, %v2113
        %v2141 = vpack.c.b16 %v2117, %v2114
        %2166 = vmatprep.subr.bf16.mxu0 %v2119
        %2167 = vmatpush1.bf16.msra.mxu0 %v2118
        %2168 = vmatprep.subr.bf16.mxu0 %v2122
        %2169 = vmatpush1.bf16.msra.mxu0 %v2121
        %2170 = vmatprep.subr.bf16.mxu0 %v2125
        %2171 = vmatpush1.bf16.msra.mxu0 %v2124
        %2172 = vmatprep.subr.bf16.mxu0 %v2128
        %2173 = vmatpush1.bf16.msra.mxu0 %v2127
        %2174 = vmatprep.subr.bf16.mxu0 %v2131
        %2175 = vmatpush1.bf16.msra.mxu0 %v2130
        %2176 = vmatprep.subr.bf16.mxu0 %v2134
        %2177 = vmatpush1.bf16.msra.mxu0 %v2133
        %2178 = vmatprep.subr.bf16.mxu0 %v2137
        %2179 = vmatpush1.bf16.msra.mxu0 %v2136
        %2180 = vmatprep.subr.bf16.mxu0 %v2140
        %2181 = vmatpush1.bf16.msra.mxu0 %v2139
        %2182 = vmatprep.subr.bf16.mxu0 0
        %2183 = vmatpush1.bf16.msra.mxu0 0
        %2184 = vmatprep.subr.bf16.mxu0 0
        %2185 = vmatpush1.bf16.msra.mxu0 0
        %2186 = vmatprep.subr.bf16.mxu0 0
        %2187 = vmatpush1.bf16.msra.mxu0 0
        %2188 = vmatprep.subr.bf16.mxu0 0
        %2189 = vmatpush1.bf16.msra.mxu0 0
        %2190 = vmatprep.subr.bf16.mxu0 0
        %2191 = vmatpush1.bf16.msra.mxu0 0
        %2192 = vmatprep.subr.bf16.mxu0 0
        %2193 = vmatpush1.bf16.msra.mxu0 0
        %2194 = vmatprep.subr.bf16.mxu0 0
        %2195 = vmatpush1.bf16.msra.mxu0 0
        %2196 = vmatprep.subr.bf16.mxu0 0
        %2197 = vmatpush1.bf16.msra.mxu0 0
        %2198 = vmatprep.mubr.bf16.mxu0 0
        %2199 = vmatmul.mubr.bf16.gmra.mrb[0].mxu0 %v1761
        %v2200 = vpop.f32.mrb[0].mxu0
        %v2201 = vadd.f32 0.0, %v2200
        %v2202 = vpop.f32.mrb[0].mxu0
        %v2203 = vadd.f32 0.0, %v2202
        %v2204 = vpop.f32.mrb[0].mxu0
        %v2205 = vadd.f32 0.0, %v2204
        %v2206 = vpop.f32.mrb[0].mxu0
        %v2207 = vadd.f32 0.0, %v2206
        %2208 = vdwg.mxu0
        %2209 = vmatprep.subr.bf16.mxu0 0
        %2210 = vmatpush1.bf16.msra.mxu0 %v2120
        %2211 = vmatprep.subr.bf16.mxu0 0
        %2212 = vmatpush1.bf16.msra.mxu0 %v2123
        %2213 = vmatprep.subr.bf16.mxu0 0
        %2214 = vmatpush1.bf16.msra.mxu0 %v2126
        %2215 = vmatprep.subr.bf16.mxu0 0
        %2216 = vmatpush1.bf16.msra.mxu0 %v2129
        %2217 = vmatprep.subr.bf16.mxu0 0
        %2218 = vmatpush1.bf16.msra.mxu0 %v2132
        %2219 = vmatprep.subr.bf16.mxu0 0
        %2220 = vmatpush1.bf16.msra.mxu0 %v2135
        %2221 = vmatprep.subr.bf16.mxu0 0
        %2222 = vmatpush1.bf16.msra.mxu0 %v2138
        %2223 = vmatprep.subr.bf16.mxu0 0
        %2224 = vmatpush1.bf16.msra.mxu0 %v2141
        %2225 = vmatprep.subr.bf16.mxu0 0
        %2226 = vmatpush1.bf16.msra.mxu0 0
        %2227 = vmatprep.subr.bf16.mxu0 0
        %2228 = vmatpush1.bf16.msra.mxu0 0
        %2229 = vmatprep.subr.bf16.mxu0 0
        %2230 = vmatpush1.bf16.msra.mxu0 0
        %2231 = vmatprep.subr.bf16.mxu0 0
        %2232 = vmatpush1.bf16.msra.mxu0 0
        %2233 = vmatprep.subr.bf16.mxu0 0
        %2234 = vmatpush1.bf16.msra.mxu0 0
        %2235 = vmatprep.subr.bf16.mxu0 0
        %2236 = vmatpush1.bf16.msra.mxu0 0
        %2237 = vmatprep.subr.bf16.mxu0 0
        %2238 = vmatpush1.bf16.msra.mxu0 0
        %2239 = vmatprep.subr.bf16.mxu0 0
        %2240 = vmatpush1.bf16.msra.mxu0 0
        %2241 = vmatprep.mubr.bf16.mxu0 0
        %2242 = vmatmul.mubr.bf16.gmra.mrb[0].mxu0 %v1761
        %v2243 = vpop.f32.mrb[0].mxu0
        %v2244 = vadd.f32 0.0, %v2243
        %v2245 = vpop.f32.mrb[0].mxu0
        %v2246 = vpop.f32.mrb[0].mxu0
        %v2247 = vadd.f32 0.0, %v2246
        %v2248 = vpop.f32.mrb[0].mxu0
        %2249 = vdwg.mxu0
        %v2250 = vsub.f32 0.0, %v1957
        %v2251 = vsub.f32 0.0, %v1959
        %v2252 = vsub.f32 0.0, %v2000
        %v2253 = vsub.f32 0.0, %v1961
        %v2254 = vsub.f32 0.0, %v1963
        %v2255 = vsub.f32 0.0, %v2003
        %v2256 = vmul.f32 %v2250, 1.442695
        %v2257 = vpow.pop %v2256
        %v2258 = vmul.f32 %v2251, 1.442695
        %v2259 = vpow.pop %v2258
        %v2260 = vmul.f32 %v2252, 1.442695
        %v2261 = vpow.pop %v2260
        %v2262 = vmul.f32 %v2253, 1.442695
        %v2263 = vpow.pop %v2262
        %v2264 = vmul.f32 %v2254, 1.442695
        %v2265 = vpow.pop %v2264
        %v2266 = vmul.f32 %v2255, 1.442695
        %v2267 = vpow.pop %v2266
        %v2268 = vadd.f32 %v2257, 1.0
        %v2269 = vadd.f32 %v2259, 1.0
        %v2270 = vadd.f32 %v2261, 1.0
        %v2271 = vadd.f32 %v2263, 1.0
        %v2272 = vadd.f32 %v2265, 1.0
        %v2273 = vadd.f32 %v2267, 1.0
        %v2274 = vrcp.pop %v2268
        %v2275 = vrcp.pop %v2269
        %v2276 = vrcp.pop %v2270
        %v2277 = vrcp.pop %v2271
        %v2278 = vrcp.pop %v2272
        %v2279 = vrcp.pop %v2273
        %v2280 = vmul.f32 %v1957, %v2274
        %v2281 = vmul.f32 %v1959, %v2275
        %v2282 = vmul.f32 %v2000, %v2276
        %v2283 = vmul.f32 %v1961, %v2277
        %v2284 = vmul.f32 %v1963, %v2278
        %v2285 = vmul.f32 %v2003, %v2279
        %v2286 = vmul.f32 %v2280, %v2201
        %v2287 = vmul.f32 %v2281, %v2203
        %v2288 = vmul.f32 %v2282, %v2244
        %v2289 = vmul.f32 %v2283, %v2205
        %v2290 = vmul.f32 %v2284, %v2207
        %v2291 = vmul.f32 %v2285, %v2247
        %v2292 = vpack.c.bf16 %v2289, %v2286
        %v2293 = vpack.c.bf16 %v2290, %v2287
        %v2294 = vpack.c.bf16 %v2291, %v2288
        %v2295 = vld [vmem:[#allocation16] sm:$0xf]
        %v2296 = vld [vmem:[#allocation16 + $0x4] sm:$0xf]
        %v2297 = vld [vmem:[#allocation16 + $0x8] sm:$0xf]
        %v2298 = vld [vmem:[#allocation16 + $0xc] sm:$0xf]
        %v2299 = vld [vmem:[#allocation16 + $0x10] sm:$0xf]
        %v2300 = vld [vmem:[#allocation16 + $0x14] sm:$0xf]
        %v2301 = vld [vmem:[#allocation16 + $0x18] sm:$0xf]
        %v2302 = vld [vmem:[#allocation16 + $0x1c] sm:$0xf]
        %v2303 = vld [vmem:[#allocation16 + $0x20] sm:$0xf]
        %v2304 = vld [vmem:[#allocation16 + $0x24] sm:$0xf]
        %v2305 = vld [vmem:[#allocation16 + $0x28] sm:$0xf]
        %v2306 = vld [vmem:[#allocation16 + $0x2c] sm:$0xf]
        %v2307 = vld [vmem:[#allocation16 + $0x30] sm:$0xf]
        %v2308 = vld [vmem:[#allocation16 + $0x34] sm:$0xf]
        %v2309 = vld [vmem:[#allocation16 + $0x38] sm:$0xf]
        %v2310 = vld [vmem:[#allocation16 + $0x3c] sm:$0xf]
        %v2311 = vld [vmem:[#allocation16 + $0x40] sm:$0xf]
        %v2312 = vld [vmem:[#allocation16 + $0x44] sm:$0xf]
        %v2313 = vld [vmem:[#allocation16 + $0x48] sm:$0xf]
        %v2314 = vld [vmem:[#allocation16 + $0x4c] sm:$0xf]
        %v2315 = vld [vmem:[#allocation16 + $0x50] sm:$0xf]
        %v2316 = vld [vmem:[#allocation16 + $0x54] sm:$0xf]
        %v2317 = vld [vmem:[#allocation16 + $0x58] sm:$0xf]
        %v2318 = vld [vmem:[#allocation16 + $0x5c] sm:$0xf]
        %v2319 = vld [vmem:[#allocation16 + $0x60] sm:$0xf]
        %v2320 = vld [vmem:[#allocation16 + $0x64] sm:$0xf]
        %v2321 = vld [vmem:[#allocation16 + $0x68] sm:$0xf]
        %v2322 = vld [vmem:[#allocation16 + $0x6c] sm:$0xf]
        %v2323 = vld [vmem:[#allocation16 + $0x70] sm:$0xf]
        %v2324 = vld [vmem:[#allocation16 + $0x74] sm:$0xf]
        %v2325 = vld [vmem:[#allocation16 + $0x78] sm:$0xf]
        %v2326 = vld [vmem:[#allocation16 + $0x7c] sm:$0xf]
        %v2327 = vld [vmem:[#allocation16 + $0x80] sm:$0xf]
        %v2328 = vld [vmem:[#allocation16 + $0x84] sm:$0xf]
        %v2329 = vld [vmem:[#allocation16 + $0x88] sm:$0xf]
        %v2330 = vld [vmem:[#allocation16 + $0x8c] sm:$0xf]
        %v2331 = vld [vmem:[#allocation16 + $0x90] sm:$0xf]
        %v2332 = vld [vmem:[#allocation16 + $0x94] sm:$0xf]
        %v2333 = vld [vmem:[#allocation16 + $0x98] sm:$0xf]
        %v2334 = vld [vmem:[#allocation16 + $0x9c] sm:$0xf]
        %v2335 = vld [vmem:[#allocation16 + $0xa0] sm:$0xf]
        %v2336 = vld [vmem:[#allocation16 + $0xa4] sm:$0xf]
        %v2337 = vld [vmem:[#allocation16 + $0xa8] sm:$0xf]
        %v2338 = vld [vmem:[#allocation16 + $0xac] sm:$0xf]
        %v2339 = vld [vmem:[#allocation16 + $0xb0] sm:$0xf]
        %v2340 = vld [vmem:[#allocation16 + $0xb4] sm:$0xf]
        %v2341 = vld [vmem:[#allocation16 + $0xb8] sm:$0xf]
        %v2342 = vld [vmem:[#allocation16 + $0xbc] sm:$0xf]
        %v2391 = vunpack.c.l.b16 %v2295
        %v2392 = vunpack.c.l.b16 %v2296
        %v2393 = vunpack.c.l.b16 %v2297
        %v2394 = vunpack.c.l.b16 %v2298
        %v2395 = vunpack.c.l.b16 %v2299
        %v2396 = vunpack.c.l.b16 %v2300
        %v2397 = vunpack.c.l.b16 %v2301
        %v2398 = vunpack.c.l.b16 %v2302
        %v2399 = vunpack.c.l.b16 %v2303
        %v2400 = vunpack.c.l.b16 %v2304
        %v2401 = vunpack.c.l.b16 %v2305
        %v2402 = vunpack.c.l.b16 %v2306
        %v2403 = vunpack.c.l.b16 %v2307
        %v2404 = vunpack.c.l.b16 %v2308
        %v2405 = vunpack.c.l.b16 %v2309
        %v2406 = vunpack.c.l.b16 %v2310
        %v2407 = vunpack.c.l.b16 %v2311
        %v2408 = vunpack.c.l.b16 %v2312
        %v2409 = vunpack.c.l.b16 %v2313
        %v2410 = vunpack.c.l.b16 %v2314
        %v2411 = vunpack.c.l.b16 %v2315
        %v2412 = vunpack.c.l.b16 %v2316
        %v2413 = vunpack.c.l.b16 %v2317
        %v2414 = vunpack.c.l.b16 %v2318
        %v2415 = vunpack.c.l.b16 %v2319
        %v2416 = vunpack.c.l.b16 %v2320
        %v2417 = vunpack.c.l.b16 %v2321
        %v2418 = vunpack.c.l.b16 %v2322
        %v2419 = vunpack.c.l.b16 %v2323
        %v2420 = vunpack.c.l.b16 %v2324
        %v2421 = vunpack.c.l.b16 %v2325
        %v2422 = vunpack.c.l.b16 %v2326
        %v2423 = vunpack.c.l.b16 %v2327
        %v2424 = vunpack.c.l.b16 %v2328
        %v2425 = vunpack.c.l.b16 %v2329
        %v2426 = vunpack.c.l.b16 %v2330
        %v2427 = vunpack.c.l.b16 %v2331
        %v2428 = vunpack.c.l.b16 %v2332
        %v2429 = vunpack.c.l.b16 %v2333
        %v2430 = vunpack.c.l.b16 %v2334
        %v2431 = vunpack.c.l.b16 %v2335
        %v2432 = vunpack.c.l.b16 %v2336
        %v2433 = vunpack.c.l.b16 %v2337
        %v2434 = vunpack.c.l.b16 %v2338
        %v2435 = vunpack.c.l.b16 %v2339
        %v2436 = vunpack.c.l.b16 %v2340
        %v2437 = vunpack.c.l.b16 %v2341
        %v2438 = vunpack.c.l.b16 %v2342
        %v2439 = vpack.c.b16 %v2392, %v2391
        %v2440 = vpack.c.b16 %v2394, %v2393
        %v2441 = vpack.c.b16 %v2396, %v2395
        %v2442 = vpack.c.b16 %v2398, %v2397
        %v2443 = vpack.c.b16 %v2400, %v2399
        %v2444 = vpack.c.b16 %v2402, %v2401
        %v2445 = vpack.c.b16 %v2404, %v2403
        %v2446 = vpack.c.b16 %v2406, %v2405
        %v2447 = vpack.c.b16 %v2408, %v2407
        %v2448 = vpack.c.b16 %v2410, %v2409
        %v2449 = vpack.c.b16 %v2412, %v2411
        %v2450 = vpack.c.b16 %v2414, %v2413
        %v2451 = vpack.c.b16 %v2416, %v2415
        %v2452 = vpack.c.b16 %v2418, %v2417
        %v2453 = vpack.c.b16 %v2420, %v2419
        %v2454 = vpack.c.b16 %v2422, %v2421
        %v2455 = vpack.c.b16 %v2424, %v2423
        %v2456 = vpack.c.b16 %v2426, %v2425
        %v2457 = vpack.c.b16 %v2428, %v2427
        %v2458 = vpack.c.b16 %v2430, %v2429
        %v2459 = vpack.c.b16 %v2432, %v2431
        %v2460 = vpack.c.b16 %v2434, %v2433
        %v2461 = vpack.c.b16 %v2436, %v2435
        %v2462 = vpack.c.b16 %v2438, %v2437
        %2487 = vmatprep.subr.bf16.mxu0 0
        %2488 = vmatpush1.bf16.msra.mxu0 %v2439
        %2489 = vmatprep.subr.bf16.mxu0 0
        %2490 = vmatpush1.bf16.msra.mxu0 %v2440
        %2491 = vmatprep.subr.bf16.mxu0 0
        %2492 = vmatpush1.bf16.msra.mxu0 %v2441
        %2493 = vmatprep.subr.bf16.mxu0 0
        %2494 = vmatpush1.bf16.msra.mxu0 %v2442
        %2495 = vmatprep.subr.bf16.mxu0 0
        %2496 = vmatpush1.bf16.msra.mxu0 %v2443
        %2497 = vmatprep.subr.bf16.mxu0 0
        %2498 = vmatpush1.bf16.msra.mxu0 %v2444
        %2499 = vmatprep.subr.bf16.mxu0 0
        %2500 = vmatpush1.bf16.msra.mxu0 %v2445
        %2501 = vmatprep.subr.bf16.mxu0 0
        %2502 = vmatpush1.bf16.msra.mxu0 %v2446
        %2503 = vmatprep.subr.bf16.mxu0 0
        %2504 = vmatpush1.bf16.msra.mxu0 %v2447
        %2505 = vmatprep.subr.bf16.mxu0 0
        %2506 = vmatpush1.bf16.msra.mxu0 %v2448
        %2507 = vmatprep.subr.bf16.mxu0 0
        %2508 = vmatpush1.bf16.msra.mxu0 %v2449
        %2509 = vmatprep.subr.bf16.mxu0 0
        %2510 = vmatpush1.bf16.msra.mxu0 %v2450
        %2511 = vmatprep.subr.bf16.mxu0 0
        %2512 = vmatpush1.bf16.msra.mxu0 %v2451
        %2513 = vmatprep.subr.bf16.mxu0 0
        %2514 = vmatpush1.bf16.msra.mxu0 %v2452
        %2515 = vmatprep.subr.bf16.mxu0 0
        %2516 = vmatpush1.bf16.msra.mxu0 %v2453
        %2517 = vmatprep.subr.bf16.mxu0 0
        %2518 = vmatpush1.bf16.msra.mxu0 %v2454
        %2519 = vmatprep.mubr.bf16.mxu0 %v2293
        %2520 = vmatmul.mubr.bf16.gmra.mrb[0].mxu0 %v2292
        %v2521 = vpop.f32.mrb[0].mxu0
        %v2522 = vadd.f32 0.0, %v2521
        %v2523 = vpop.f32.mrb[0].mxu0
        %v2524 = vpop.f32.mrb[0].mxu0
        %v2525 = vadd.f32 0.0, %v2524
        %v2526 = vpop.f32.mrb[0].mxu0
        %2527 = vdwg.mxu0
        %2528 = vmatprep.subr.bf16.mxu0 0
        %2529 = vmatpush1.bf16.msra.mxu0 %v2455
        %2530 = vmatprep.subr.bf16.mxu0 0
        %2531 = vmatpush1.bf16.msra.mxu0 %v2456
        %2532 = vmatprep.subr.bf16.mxu0 0
        %2533 = vmatpush1.bf16.msra.mxu0 %v2457
        %2534 = vmatprep.subr.bf16.mxu0 0
        %2535 = vmatpush1.bf16.msra.mxu0 %v2458
        %2536 = vmatprep.subr.bf16.mxu0 0
        %2537 = vmatpush1.bf16.msra.mxu0 %v2459
        %2538 = vmatprep.subr.bf16.mxu0 0
        %2539 = vmatpush1.bf16.msra.mxu0 %v2460
        %2540 = vmatprep.subr.bf16.mxu0 0
        %2541 = vmatpush1.bf16.msra.mxu0 %v2461
        %2542 = vmatprep.subr.bf16.mxu0 0
        %2543 = vmatpush1.bf16.msra.mxu0 %v2462
        %2544 = vmatprep.subr.bf16.mxu0 0
        %2545 = vmatpush1.bf16.msra.mxu0 0
        %2546 = vmatprep.subr.bf16.mxu0 0
        %2547 = vmatpush1.bf16.msra.mxu0 0
        %2548 = vmatprep.subr.bf16.mxu0 0
        %2549 = vmatpush1.bf16.msra.mxu0 0
        %2550 = vmatprep.subr.bf16.mxu0 0
        %2551 = vmatpush1.bf16.msra.mxu0 0
        %2552 = vmatprep.subr.bf16.mxu0 0
        %2553 = vmatpush1.bf16.msra.mxu0 0
        %2554 = vmatprep.subr.bf16.mxu0 0
        %2555 = vmatpush1.bf16.msra.mxu0 0
        %2556 = vmatprep.subr.bf16.mxu0 0
        %2557 = vmatpush1.bf16.msra.mxu0 0
        %2558 = vmatprep.subr.bf16.mxu0 0
        %2559 = vmatpush1.bf16.msra.mxu0 0
        %2560 = vmatprep.mubr.bf16.mxu0 0
        %2561 = vmatmul.mubr.bf16.gmra.mrb[0].mxu0 %v2294
        %v2562 = vpop.f32.mrb[0].mxu0
        %v2563 = vadd.f32 %v2522, %v2562
        %v2564 = vpop.f32.mrb[0].mxu0
        %v2565 = vpop.f32.mrb[0].mxu0
        %v2566 = vadd.f32 %v2525, %v2565
        %v2567 = vpop.f32.mrb[0].mxu0
        %2568 = vdwg.mxu0
        %v2569 = vadd.f32 %v1736, %v2563
        %v2570 = vadd.f32 %v1737, %v2566
        %2571 = vst [vmem:[%s562] sm:$0xff] %v2569
        %2572 = vst [vmem:[%s562 + $0x8] sm:$0xff] %v2570
        %s2573 = sand.u32 %s299, 1
        %s2574 = scalar_lea.sflag [#allocation4], %s2573
        %s2575 = sand.u32 %s299, 1
        %s2576 = smul.addr %s2575, 16
        %s2577 = scalar_lea.vmem [#allocation19], %s2576
        // Predicated region
        $region109: #{tpu_custom_call.1} parent=67 // pred_check
          %p2578 = pneg %p309
        $region110: #{tpu_custom_call.1} parent=67 // pred_check_branch
          %2580 = sbr.rel (%p2578) target = $region112
        $region111: #{tpu_custom_call.1} parent=67 // pred_region
          %s2582 = ssub.s32 256, 256
          %2583 = vsyncadd %s2574, %s2582
          %s2584 = smul.addr %s34, 2
          %s2585 = smul.addr %s2584, 128
          %s2586 = scalar_lea.hbm %s12, %s2585
          %s2587 = sshll.u32 %s2577, 4
          %s2588 = int_to_ptr.vmem [resolvable:$true] %s2587
          %2593 = dma.vmem_to_hbm [thread:$0]  %s2588, 256, %s2586, %s2574, 128, 128, 8
        $region112: #{tpu_custom_call.1} parent=67 // pred_fallthru
          _
      $region68: #{tpu_custom_call.1} parent=5 // pred_fallthru
        _
      %p2594 = scmp.le.s32.totalorder 2, %s29
      // Predicated region
      $region113: #{tpu_custom_call.1} parent=5 // pred_check
        %p2595 = pneg %p2594
      $region114: #{tpu_custom_call.1} parent=5 // pred_check_branch
        %2597 = sbr.rel (%p2595) target = $region116
      $region115: #{tpu_custom_call.1} parent=5 // pred_region
        %s2598 = ssub.s32 %s29, 2
        // Predicated region
        $region117: #{tpu_custom_call.1} parent=115 // pred_check
          %p2599 = pneg %p315
        $region118: #{tpu_custom_call.1} parent=115 // pred_check_branch
          %2601 = sbr.rel (%p2599) target = $region120
        $region119: #{tpu_custom_call.1} parent=115 // pred_region
          %s2602 = sand.u32 %s300, 1
          %s2603 = scalar_lea.sflag [#allocation4], %s2602
          %s2604 = sand.u32 %s300, 1
          %s2605 = smul.addr %s2604, 16
          %s2606 = scalar_lea.vmem [#allocation19], %s2605
          %2607 = dma.done %s2603, 256
        $region120: #{tpu_custom_call.1} parent=115 // pred_fallthru
          _
      $region116: #{tpu_custom_call.1} parent=5 // pred_fallthru
        _
    $region6: #{tpu_custom_call.1} parent=1 // loop_footer
      %s33 = sadd.s32 1, %s29
    $region7: #{tpu_custom_call.1} parent=1 // loop_footer_branch
      %28 = sbr.rel target = $region3
    $region8: #{tpu_custom_call.1} parent=1 // loop_exit
      _
    %2608 = vsyncpa [#allocation3], 1
    %s2609 = scalar_lea.sflag [#allocation3], 1
    %2610 = vsyncpa %s2609, 1
    %2611 = vsyncpa [#allocation6], 1
    %2612 = vsyncpa [#allocation9], 1
    %2613 = vsyncpa [#allocation12], 1
    %2614 = vsyncpa [#allocation15], 1
    %2615 = vsyncpa [#allocation18], 1
    %2616 = vsyncpa [#allocation4], 1
    %s2617 = scalar_lea.sflag [#allocation4], 1
    %2618 = vsyncpa %s2617, 1

</llo_original>
